<compile_context>
chip_gen: v7x
topology: tpu7x:2x2x1
jax: 0.10.0
libtpu: 0.0.40
codegen_flags: <defaults>
</compile_context>

<pallas_src>
import functools

import jax
import jax.numpy as jnp
import numpy as np
from jax import lax
from jax.experimental import pallas as pl
from jax.experimental.pallas import tpu as pltpu


def _round_up(x: int, m: int) -> int:
    return ((x + m - 1) // m) * m


def _lane(f: int) -> int:
    # lane-padded width used only for VMEM accounting (VMEM tiles pad to 128)
    return max(_round_up(f, 128), 128)


def _choose_tm(n_rows: int, tm_req: int) -> int:
    """Row tile: multiple of 8, >=2 grid steps when possible (v7x has 2 TCs),
    and -- when we can -- an exact divisor of n_rows so no pad/un-pad copies."""
    tm = max(8, _round_up(min(tm_req, n_rows), 8))
    if n_rows > 8:                                   # keep >= 2 grid steps
        tm = min(tm, _round_up((n_rows + 1) // 2, 8))
    if n_rows % tm == 0:
        return tm
    lo = max(128, tm // 2)
    for cand in range(tm - 8, lo - 1, -8):           # prefer exact divisor of N
        if n_rows % cand == 0:
            return cand
    return tm


def _pick_row_block(tm: int, target: int = 256) -> int:
    """Largest multiple of 8 <= target dividing tm (bounds live vreg pressure)."""
    if tm <= target:
        return tm
    rb = target
    while rb > 8 and tm % rb:
        rb -= 8
    return rb if tm % rb == 0 else tm


def _vmem_limit(need_bytes: int) -> int:
    try:
        cap = int(pltpu.get_tpu_info().vmem_capacity_bytes) * 3 // 4
    except Exception:                                # info query unavailable
        cap = 48 << 20                               # safe on every generation
    return int(min(max(need_bytes, 8 << 20), cap))


# ---------------------------------------------------------------------------
# Single SirenLayer:  y = x @ W' + b'   ;   out = sin(y) unless is_last
# (w0 already folded into W', b' by the wrapper for non-last layers)
# ---------------------------------------------------------------------------
def _siren_kernel(x_ref, w_ref, b_ref, o_ref, *, apply_sin):
    w = w_ref[...]
    y = jnp.dot(x_ref[...].astype(w.dtype), w,
                preferred_element_type=jnp.float32)          # MXU, f32 accum
    y = y + b_ref[...]                                        # f32 bias add
    if apply_sin:
        y = jnp.sin(y)                                        # f32 VPU
    o_ref[...] = y.astype(o_ref.dtype)


def siren_layer(x, weight, bias, *, w0=30.0, is_last=False, tm=1024,
                param_dtype=jnp.bfloat16, out_dtype=None):
    """SIREN layer forward.

    x      : (N, in_f)
    weight : (in_f, out_f)  -- pre-transposed nn.Linear weight (== weight.T)
    bias   : (out_f,)
    """
    N, in_f = x.shape
    assert weight.shape[0] == in_f, "weight must be (in_f, out_f)"
    out_f = weight.shape[1]
    out_dtype = jnp.dtype(out_dtype or x.dtype)

    # Fold w0 into the parameters in f32, then (optionally) cast weights.
    w = weight.astype(jnp.float32)
    b = bias.astype(jnp.float32)
    if not is_last:
        w = w0 * w
        b = w0 * b
    w = w.astype(param_dtype)
    b = b.reshape(1, out_f)                                   # bias stays f32

    tm = _choose_tm(N, tm)
    n_pad = _round_up(N, tm)
    xp = x if n_pad == N else jnp.pad(x, ((0, n_pad - N), (0, 0)))

    need = (2 * tm * _lane(in_f) * x.dtype.itemsize
            + 2 * tm * _lane(out_f) * out_dtype.itemsize
            + 2 * (_round_up(in_f, 8) * _lane(out_f) * w.dtype.itemsize
                   + _lane(out_f) * 4)
            + (4 << 20))

    out = pl.pallas_call(
        functools.partial(_siren_kernel, apply_sin=not is_last),
        out_shape=jax.ShapeDtypeStruct((n_pad, out_f), out_dtype),
        grid_spec=pltpu.PrefetchScalarGridSpec(
            num_scalar_prefetch=0,
            grid=(n_pad // tm,),
            in_specs=[
                pl.BlockSpec((tm, in_f), lambda i: (i, 0)),      # x rows
                pl.BlockSpec((in_f, out_f), lambda i: (0, 0)),   # resident W
                pl.BlockSpec((1, out_f), lambda i: (0, 0)),      # resident b
            ],
            out_specs=pl.BlockSpec((tm, out_f), lambda i: (i, 0)),
        ),
        compiler_params=pltpu.CompilerParams(
            dimension_semantics=("parallel",),
            vmem_limit_bytes=_vmem_limit(need)),
    )(xp, w, b)

    return out if n_pad == N else out[:N]


# ---------------------------------------------------------------------------
# Fused SIREN stack: all layers in one pallas_call; activations never hit HBM.
# ---------------------------------------------------------------------------
def _siren_stack_kernel(*refs, n_layers, apply_sin, row_block, n_sub):
    x_ref = refs[0]
    w_refs = refs[1:1 + n_layers]
    b_refs = refs[1 + n_layers:1 + 2 * n_layers]
    o_ref = refs[1 + 2 * n_layers]

    def run_rows(h):
        for l in range(n_layers):
            w = w_refs[l][...]
            y = jnp.dot(h.astype(w.dtype), w,
                        preferred_element_type=jnp.float32)
            y = y + b_refs[l][...]
            h = jnp.sin(y) if apply_sin[l] else y
        return h

    if n_sub == 1:
        o_ref[...] = run_rows(x_ref[...]).astype(o_ref.dtype)
    else:
        # Large DMA tile, bounded vreg/VMEM pressure: rolled loop over
        # row_block-row sub-tiles.
        def body(s, carry):
            r = pl.multiple_of(s * row_block, row_block)
            h = run_rows(x_ref[pl.ds(r, row_block), :])
            o_ref[pl.ds(r, row_block), :] = h.astype(o_ref.dtype)
            return carry
        lax.fori_loop(0, n_sub, body, 0)


def siren_mlp(x, weights, biases, *, w0=30.0, tm=1024, row_block=256,
              param_dtype=jnp.bfloat16, out_dtype=None):
    """Fused SIREN MLP (sin on all but the last layer). weights[l]: (f_l, f_{l+1})."""
    n_layers = len(weights)
    N, in_f = x.shape
    widths = [in_f] + [w.shape[1] for w in weights]
    out_f = widths[-1]
    out_dtype = jnp.dtype(out_dtype or x.dtype)
    w0s = ((float(w0),) * n_layers if np.isscalar(w0)
           else tuple(float(v) for v in w0))
    apply_sin = tuple(l != n_layers - 1 for l in range(n_layers))

    ws, bs = [], []
    for l, (w, b) in enumerate(zip(weights, biases)):
        assert w.shape == (widths[l], widths[l + 1])
        wf = w.astype(jnp.float32)
        bf = b.astype(jnp.float32)
        if apply_sin[l]:                      # fold w0 in f32 before bf16 cast
            wf = w0s[l] * wf
            bf = w0s[l] * bf
        ws.append(wf.astype(param_dtype))
        bs.append(bf.reshape(1, widths[l + 1]))

    tm = _choose_tm(N, tm)
    rb = _pick_row_block(tm, row_block)
    n_sub = tm // rb
    n_pad = _round_up(N, tm)
    xp = x if n_pad == N else jnp.pad(x, ((0, n_pad - N), (0, 0)))

    need = (2 * tm * _lane(in_f) * x.dtype.itemsize
            + 2 * tm * _lane(out_f) * out_dtype.itemsize
            + 2 * sum(_round_up(widths[l], 8) * _lane(widths[l + 1])
                      * jnp.dtype(param_dtype).itemsize
                      + _lane(widths[l + 1]) * 4 for l in range(n_layers))
            + 4 * rb * max(_lane(f) for f in widths) * 4   # live activations
            + (4 << 20))

    in_specs = [pl.BlockSpec((tm, in_f), lambda i: (i, 0))]
    for l in range(n_layers):
        in_specs.append(pl.BlockSpec((widths[l], widths[l + 1]),
                                     lambda i: (0, 0)))
    for l in range(n_layers):
        in_specs.append(pl.BlockSpec((1, widths[l + 1]), lambda i: (0, 0)))

    kernel = functools.partial(_siren_stack_kernel, n_layers=n_layers,
                               apply_sin=apply_sin, row_block=rb, n_sub=n_sub)
    out = pl.pallas_call(
        kernel,
        out_shape=jax.ShapeDtypeStruct((n_pad, out_f), out_dtype),
        grid_spec=pltpu.PrefetchScalarGridSpec(
            num_scalar_prefetch=0,
            grid=(n_pad // tm,),
            in_specs=in_specs,
            out_specs=pl.BlockSpec((tm, out_f), lambda i: (i, 0)),
        ),
        compiler_params=pltpu.CompilerParams(
            dimension_semantics=("parallel",),
            vmem_limit_bytes=_vmem_limit(need)),
    )(xp, *ws, *bs)
    return out if n_pad == N else out[:N]


# ---------------------------------------------------------------------------
# Parameter init matching SirenLayer.__init__ (weight stored pre-transposed).
# ---------------------------------------------------------------------------
def init_siren_params(key, in_f, out_f, *, w0=30.0, is_first=False):
    """Returns (weight_T, bias) with weight_T of shape (in_f, out_f)."""
    kw, kb = jax.random.split(key)
    b = (1.0 / in_f) if is_first else (np.sqrt(6.0 / in_f) / w0)
    weight_t = jax.random.uniform(kw, (in_f, out_f), jnp.float32, -b, b)
    bb = 1.0 / np.sqrt(in_f)            # PyTorch nn.Linear default bias init
    bias = jax.random.uniform(kb, (out_f,), jnp.float32, -bb, bb)
    return weight_t, bias


# ---------------------------------------------------------------------------
# Reference (same bf16 operand rounding / w0 folding as the kernel).
# ---------------------------------------------------------------------------
def _ref_layer(x, weight, bias, *, w0, is_last, param_dtype=jnp.bfloat16):
    wf = weight.astype(jnp.float32)
    bf = bias.astype(jnp.float32).reshape(1, -1)
    if not is_last:
        wf = w0 * wf
        bf = w0 * bf
    xb = x.astype(param_dtype).astype(jnp.float32)
    wb = wf.astype(param_dtype).astype(jnp.float32)
    y = xb @ wb + bf
    return y if is_last else jnp.sin(y)


if __name__ == "__main__":
    key = jax.random.PRNGKey(0)
    k_x1, k_x2, k_x3, k_a, k_b, k0, k1, k2 = jax.random.split(key, 8)
    w0 = 30.0

    # ---- single SirenLayer, first layer 2 -> 32 (N NOT a tile multiple) ----
    N1 = 300
    x1 = jax.random.uniform(k_x1, (N1, 2), jnp.float32, -1.0, 1.0)
    w_a, b_a = init_siren_params(k_a, 2, 32, w0=w0, is_first=True)
    out1 = jax.block_until_ready(siren_layer(x1, w_a, b_a, w0=w0, is_last=False))
    ref1 = _ref_layer(x1, w_a, b_a, w0=w0, is_last=False)
    np.testing.assert_allclose(np.asarray(out1), np.asarray(ref1),
                               rtol=2e-3, atol=2e-3)

    # ---- single SirenLayer, last (linear) layer 32 -> 3 ---------------------
    w_b, b_b = init_siren_params(k_b, 32, 3, w0=w0, is_first=False)
    out_last = jax.block_until_ready(
        siren_layer(ref1, w_b, b_b, w0=w0, is_last=True))
    ref_last = _ref_layer(ref1, w_b, b_b, w0=w0, is_last=True)
    np.testing.assert_allclose(np.asarray(out_last), np.asarray(ref_last),
                               rtol=2e-3, atol=2e-3)

    # ---- fused SIREN stack 2 -> 32 -> 32 -> 3 -------------------------------
    dims = [2, 32, 32, 3]
    params = [init_siren_params(k, dims[l], dims[l + 1], w0=w0,
                                is_first=(l == 0))
              for l, k in enumerate([k0, k1, k2])]
    weights = [p[0] for p in params]
    biases = [p[1] for p in params]

    def ref_mlp(x):
        h = x
        for l, (w, b) in enumerate(zip(weights, biases)):
            h = _ref_layer(h, w, b, w0=w0, is_last=(l == len(weights) - 1))
        return h

    # small N: exact-divisor tile (no pad/slice), single row sub-tile path
    N2 = 256
    x2 = jax.random.uniform(k_x2, (N2, 2), jnp.float32, -1.0, 1.0)
    out2 = jax.block_until_ready(siren_mlp(x2, weights, biases, w0=w0))
    np.testing.assert_allclose(np.asarray(out2), np.asarray(ref_mlp(x2)),
                               rtol=1e-2, atol=5e-3)

    # larger N: exercises the inner fori_loop row sub-tiling (tm=1024, rb=256)
    N3 = 2048
    x3 = jax.random.uniform(k_x3, (N3, 2), jnp.float32, -1.0, 1.0)
    out3 = jax.block_until_ready(siren_mlp(x3, weights, biases, w0=w0))
    np.testing.assert_allclose(np.asarray(out3), np.asarray(ref_mlp(x3)),
                               rtol=1e-2, atol=5e-3)

    print("KERNEL_OK")
</pallas_src>

<mosaic_0001>
module attributes {stable_mosaic.version = 11 : i64} {
  func.func @_siren_kernel(%arg0: i32, %arg1: memref<152x2xf32, #tpu.memory_space<vmem>>, %arg2: memref<2x32xbf16, #tpu.memory_space<vmem>>, %arg3: memref<1x32xf32, #tpu.memory_space<vmem>>, %arg4: memref<152x32xf32, #tpu.memory_space<vmem>>) attributes {dimension_semantics = [#tpu.dimension_semantics<parallel>], iteration_bounds = array<i64: 2>, scalar_prefetch = 0 : i64, scratch_operands = 0 : i64, tpu.core_type = #tpu.core_type<tc>, window_params = [{transform_indices = @transform_0, window_bounds = array<i64: 152, 2>}, {pipeline_mode = #tpu.pipeline_mode<synchronous>, transform_indices = @transform_1, window_bounds = array<i64: 2, 32>}, {pipeline_mode = #tpu.pipeline_mode<synchronous>, transform_indices = @transform_2, window_bounds = array<i64: 1, 32>}, {transform_indices = @transform_3, window_bounds = array<i64: 152, 32>}]} {
    %c0 = arith.constant 0 : index
    %c0_0 = arith.constant 0 : index
    %0 = vector.load %arg2[%c0, %c0_0] : memref<2x32xbf16, #tpu.memory_space<vmem>>, vector<2x32xbf16>
    %c0_1 = arith.constant 0 : index
    %c0_2 = arith.constant 0 : index
    %1 = vector.load %arg1[%c0_1, %c0_2] : memref<152x2xf32, #tpu.memory_space<vmem>>, vector<152x2xf32>
    %2 = arith.truncf %1 : vector<152x2xf32> to vector<152x2xbf16>
    %cst = arith.constant dense<0.000000e+00> : vector<152x32xf32>
    %3 = tpu.matmul %2, %0, %cst {dimension_numbers = #tpu.dot_dimension_numbers<[1], [0], [0], [1], [0, 0, 1, 1], [], []>} : vector<152x2xbf16>, vector<2x32xbf16>, vector<152x32xf32> -> vector<152x32xf32>
    %c0_3 = arith.constant 0 : index
    %c0_4 = arith.constant 0 : index
    %4 = vector.load %arg3[%c0_3, %c0_4] : memref<1x32xf32, #tpu.memory_space<vmem>>, vector<1x32xf32>
    %5 = vector.broadcast %4 : vector<1x32xf32> to vector<152x32xf32>
    %6 = arith.addf %3, %5 : vector<152x32xf32>
    %7 = math.sin %6 : vector<152x32xf32>
    %c0_5 = arith.constant 0 : index
    %c0_6 = arith.constant 0 : index
    %8 = vector.load %arg4[%c0_5, %c0_6] : memref<152x32xf32, #tpu.memory_space<vmem>>, vector<152x32xf32>
    tpu.vector_store %arg4[%c0_5, %c0_6], %7 {strides = array<i32>} : memref<152x32xf32, #tpu.memory_space<vmem>>, vector<152x32xf32>,
    return
  }
  func.func @transform_0(%arg0: i32) -> (i32, i32) {
    %c0_i32 = arith.constant 0 : i32
    %c0_i32_0 = arith.constant 0 : i32
    return %arg0, %c0_i32 : i32, i32
  }
  func.func @transform_1(%arg0: i32) -> (i32, i32) {
    %c0_i32 = arith.constant 0 : i32
    %c0_i32_0 = arith.constant 0 : i32
    %c0_i32_1 = arith.constant 0 : i32
    return %c0_i32, %c0_i32_0 : i32, i32
  }
  func.func @transform_2(%arg0: i32) -> (i32, i32) {
    %c0_i32 = arith.constant 0 : i32
    %c0_i32_0 = arith.constant 0 : i32
    %c0_i32_1 = arith.constant 0 : i32
    return %c0_i32, %c0_i32_0 : i32, i32
  }
  func.func @transform_3(%arg0: i32) -> (i32, i32) {
    %c0_i32 = arith.constant 0 : i32
    %c0_i32_0 = arith.constant 0 : i32
    return %arg0, %c0_i32 : i32, i32
  }
}

</mosaic_0001>

<llo_original>
// kernel: tpu_custom_call.1
$region0: #{tpu_custom_call.1}
  #allocation0 [shape = 'u32[]', space=smem, size = 0x4, offset = 0x4, fixed_abs, tag = 'smem constant byte address 0x4 - core index']
  #allocation1 [shape = 'u32[144,128]{1,0:T(1,128)}', space=vmem, size = 0x12000, scoped, tag = 'internal scratch']
  %s0 = inlined_call_operand.vmem [shape: f32[304,2], index: 0, kind: input, shape index: {}]
  %s1 = inlined_call_operand.vmem [shape: bf16[2,32], index: 1, kind: input, shape index: {}]
  %s2 = inlined_call_operand.vmem [shape: f32[1,32], index: 2, kind: input, shape index: {}]
  %s3 = inlined_call_operand.vmem [shape: f32[304,32], index: 3, kind: output, shape index: {}]
  %s4 = sld [smem:[#allocation0]]
  $region45: #{tpu_custom_call.1} parent=0
    _
  %s6 = ssub.s32 1, %s4
  %s7 = scalar_select 0, %s6, %s4
  loop: start=0, step=1, limit=4
  $region2: #{tpu_custom_call.1} parent=0 // loop_pre_header
    _
  $region3: #{tpu_custom_call.1} parent=0 // loop_header
    %s9 = sphi 0, %s13
    %p10 = scmp.ge.s32.totalorder %s9, 4
    %s19 = sphi 0, %s21
    %s22 = sphi 0, %s19
    %s23 = sphi 0, %s22
    %s39 = sphi 0, %s23
    %s43 = sphi 0, %s43
    %s45 = sphi 0, %s43
    %s46 = sphi 0, %s45
    %s60 = sphi 0, %s46
    %s64 = sphi 0, %s64
    %s66 = sphi 0, %s64
    %s67 = sphi 0, %s66
    %s81 = sphi 0, %s67
    %s87 = sphi 0, %s89
    %s90 = sphi 0, %s87
    %s91 = sphi 0, %s90
    %s107 = sphi 0, %s91
  $region4: #{tpu_custom_call.1} parent=0 // loop_header_branch
    %12 = sbr.rel (%p10) target = $region8
  $region5: #{tpu_custom_call.1} parent=0 // loop_body
    %s14 = ssub.s32 %s9, 1
    %s15 = ssub.s32 %s9, 2
    %s16 = sadd.s32 %s9, 1
    %s17 = ssub.s32 %s9, %s16
    %p18 = scmp.eq.s32.totalorder %s17, 0
    %s20 = sadd.s32 %s19, 1
    %s21 = scalar_select %p18, %s19, %s20
    %p24 = pneg %p18
    %p25 = scmp.eq.s32.totalorder %s9, 1
    %p26 = por %p24, %p25
    %p27 = scmp.ne.s32.totalorder %s19, %s22
    %p28 = scmp.eq.s32.totalorder %s9, 0
    %p29 = por %p27, %p28
    %p30 = scmp.ne.s32.totalorder %s19, %s22
    %p31 = scmp.eq.s32.totalorder %s14, 1
    %p32 = por %p30, %p31
    %p33 = scmp.ne.s32.totalorder %s22, %s23
    %p34 = scmp.eq.s32.totalorder %s14, 0
    %p35 = por %p33, %p34
    %p36 = scmp.ne.s32.totalorder %s22, %s23
    %p37 = scmp.eq.s32.totalorder %s15, 1
    %p38 = por %p36, %p37
    %p40 = scmp.ne.s32.totalorder %s23, %s39
    %p41 = scmp.eq.s32.totalorder %s15, 0
    %p42 = por %p40, %p41
    %s44 = sadd.s32 %s43, 1
    %p47 = scmp.eq.s32.totalorder %s9, 1
    %p48 = scmp.ne.s32.totalorder %s43, %s45
    %p49 = scmp.eq.s32.totalorder %s9, 0
    %p50 = por %p48, %p49
    %p51 = scmp.ne.s32.totalorder %s43, %s45
    %p52 = scmp.eq.s32.totalorder %s14, 1
    %p53 = por %p51, %p52
    %p54 = scmp.ne.s32.totalorder %s45, %s46
    %p55 = scmp.eq.s32.totalorder %s14, 0
    %p56 = por %p54, %p55
    %p57 = scmp.ne.s32.totalorder %s45, %s46
    %p58 = scmp.eq.s32.totalorder %s15, 1
    %p59 = por %p57, %p58
    %p61 = scmp.ne.s32.totalorder %s46, %s60
    %p62 = scmp.eq.s32.totalorder %s15, 0
    %p63 = por %p61, %p62
    %s65 = sadd.s32 %s64, 1
    %p68 = scmp.eq.s32.totalorder %s9, 1
    %p69 = scmp.ne.s32.totalorder %s64, %s66
    %p70 = scmp.eq.s32.totalorder %s9, 0
    %p71 = por %p69, %p70
    %p72 = scmp.ne.s32.totalorder %s64, %s66
    %p73 = scmp.eq.s32.totalorder %s14, 1
    %p74 = por %p72, %p73
    %p75 = scmp.ne.s32.totalorder %s66, %s67
    %p76 = scmp.eq.s32.totalorder %s14, 0
    %p77 = por %p75, %p76
    %p78 = scmp.ne.s32.totalorder %s66, %s67
    %p79 = scmp.eq.s32.totalorder %s15, 1
    %p80 = por %p78, %p79
    %p82 = scmp.ne.s32.totalorder %s67, %s81
    %p83 = scmp.eq.s32.totalorder %s15, 0
    %p84 = por %p82, %p83
    %s85 = ssub.s32 %s9, %s16
    %p86 = scmp.eq.s32.totalorder %s85, 0
    %s88 = sadd.s32 %s87, 1
    %s89 = scalar_select %p86, %s87, %s88
    %p92 = pneg %p86
    %p93 = scmp.eq.s32.totalorder %s9, 1
    %p94 = por %p92, %p93
    %p95 = scmp.ne.s32.totalorder %s87, %s90
    %p96 = scmp.eq.s32.totalorder %s9, 0
    %p97 = por %p95, %p96
    %p98 = scmp.ne.s32.totalorder %s87, %s90
    %p99 = scmp.eq.s32.totalorder %s14, 1
    %p100 = por %p98, %p99
    %p101 = scmp.ne.s32.totalorder %s90, %s91
    %p102 = scmp.eq.s32.totalorder %s14, 0
    %p103 = por %p101, %p102
    %p104 = scmp.ne.s32.totalorder %s90, %s91
    %p105 = scmp.eq.s32.totalorder %s15, 1
    %p106 = por %p104, %p105
    %p108 = scmp.ne.s32.totalorder %s91, %s107
    %p109 = scmp.eq.s32.totalorder %s15, 0
    %p110 = por %p108, %p109
    %p111 = scmp.le.s32.totalorder 1, %s9
    %p112 = scmp.lt.s32.totalorder %s9, 3
    %p113 = pnand %p111, %p112
    %p114 = pneg %p113
    // Predicated region
    $region9: #{tpu_custom_call.1} parent=5 // pred_check
      _
    $region10: #{tpu_custom_call.1} parent=5 // pred_check_branch
      %116 = sbr.rel (%p113) target = $region12
    $region11: #{tpu_custom_call.1} parent=5 // pred_region
      %s117 = ssub.s32 %s9, 1
      // Predicated region
      $region13: #{tpu_custom_call.1} parent=11 // pred_check
        %p118 = pneg %p56
      $region14: #{tpu_custom_call.1} parent=11 // pred_check_branch
        %120 = sbr.rel (%p118) target = $region16
      $region15: #{tpu_custom_call.1} parent=11 // pred_region
        _
      $region16: #{tpu_custom_call.1} parent=11 // pred_fallthru
        _
      // Predicated region
      $region17: #{tpu_custom_call.1} parent=11 // pred_check
        %p121 = pneg %p77
      $region18: #{tpu_custom_call.1} parent=11 // pred_check_branch
        %123 = sbr.rel (%p121) target = $region20
      $region19: #{tpu_custom_call.1} parent=11 // pred_region
        _
      $region20: #{tpu_custom_call.1} parent=11 // pred_fallthru
        _
    $region12: #{tpu_custom_call.1} parent=5 // pred_fallthru
      _
    %p124 = scmp.lt.s32.totalorder %s9, 2
    // Predicated region
    $region21: #{tpu_custom_call.1} parent=5 // pred_check
      %p125 = pneg %p124
    $region22: #{tpu_custom_call.1} parent=5 // pred_check_branch
      %127 = sbr.rel (%p125) target = $region24
    $region23: #{tpu_custom_call.1} parent=5 // pred_region
      // Predicated region
      $region25: #{tpu_custom_call.1} parent=23 // pred_check
        %p128 = pneg %p29
      $region26: #{tpu_custom_call.1} parent=23 // pred_check_branch
        %130 = sbr.rel (%p128) target = $region28
      $region27: #{tpu_custom_call.1} parent=23 // pred_region
        %s131 = smul.u32 19, %s9
        %p132 = scmp.lt.s32.totalorder %s131, 37
        %s133 = scalar_select %p132, %s131, 37
        %s134 = smul.addr %s133, 8
        %s135 = scalar_lea.vmem %s0, %s134
        %s136 = smul.u32 19, %s9
      $region28: #{tpu_custom_call.1} parent=23 // pred_fallthru
        _
    $region24: #{tpu_custom_call.1} parent=5 // pred_fallthru
      _
    %p137 = scmp.le.s32.totalorder 1, %s9
    %p138 = scmp.lt.s32.totalorder %s9, 3
    %p139 = pnand %p137, %p138
    %p140 = pneg %p139
    // Predicated region
    $region29: #{tpu_custom_call.1} parent=5 // pred_check
      _
    $region30: #{tpu_custom_call.1} parent=5 // pred_check_branch
      %142 = sbr.rel (%p139) target = $region32
    $region31: #{tpu_custom_call.1} parent=5 // pred_region
      %s143 = ssub.s32 %s9, 1
      %s144 = smul.u32 19, %s14
      %p145 = scmp.lt.s32.totalorder %s144, 37
      %s146 = scalar_select %p145, %s144, 37
      %s147 = smul.addr %s146, 8
      %s148 = scalar_lea.vmem %s0, %s147
      %p149 = pneg %p35
      %p150 = pneg %p32
      %p151 = pneg %p56
      %p152 = pneg %p53
      %p153 = pneg %p77
      %p154 = pneg %p74
      %p155 = pneg %p103
      %p156 = pneg %p100
      %s157 = smul.u32 19, %s14
      %p158 = scmp.lt.s32.totalorder %s157, 37
      %s159 = scalar_select %p158, %s157, 37
      %s160 = smul.addr %s159, 8
      %s161 = scalar_lea.vmem %s3, %s160
      %s162 = smul.u32 19, %s14
      %p163 = scmp.lt.s32.totalorder %s162, 37
      %s164 = scalar_select %p163, %s162, 37
      %s165 = smul.addr %s164, 8
      %s166 = scalar_lea.vmem %s0, %s165
      %s167 = smul.u32 19, %s14
      %s168 = smul.u32 19, %s14
      %p169 = scmp.lt.s32.totalorder %s168, 37
      %s170 = scalar_select %p169, %s168, 37
      %s171 = smul.addr %s170, 8
      %s172 = scalar_lea.vmem %s3, %s171
      %s173 = smul.u32 19, %s14
      %v175 = vld [vmem:[%s1] sm:$0x1]
      %v176 = vld [vmem:[%s166] sm:$0xff]
      %v177 = vld [vmem:[%s166 + $0x8] sm:$0xff]
      %v178 = vld [vmem:[%s166 + $0x10] sm:$0xff]
      %v179 = vld [vmem:[%s166 + $0x18] sm:$0xff]
      %v180 = vld [vmem:[%s166 + $0x20] sm:$0xff]
      %v181 = vld [vmem:[%s166 + $0x28] sm:$0xff]
      %v182 = vld [vmem:[%s166 + $0x30] sm:$0xff]
      %v183 = vld [vmem:[%s166 + $0x38] sm:$0xff]
      %v184 = vld [vmem:[%s166 + $0x40] sm:$0xff]
      %v185 = vld [vmem:[%s166 + $0x48] sm:$0xff]
      %v186 = vld [vmem:[%s166 + $0x50] sm:$0xff]
      %v187 = vld [vmem:[%s166 + $0x58] sm:$0xff]
      %v188 = vld [vmem:[%s166 + $0x60] sm:$0xff]
      %v189 = vld [vmem:[%s166 + $0x68] sm:$0xff]
      %v190 = vld [vmem:[%s166 + $0x70] sm:$0xff]
      %v191 = vld [vmem:[%s166 + $0x78] sm:$0xff]
      %v192 = vld [vmem:[%s166 + $0x80] sm:$0xff]
      %v193 = vld [vmem:[%s166 + $0x88] sm:$0xff]
      %v194 = vld [vmem:[%s166 + $0x90] sm:$0xff]
      %v195 = vpack.c.bf16 %v177, %v176
      %v196 = vpack.c.bf16 %v179, %v178
      %v197 = vpack.c.bf16 %v181, %v180
      %v198 = vpack.c.bf16 %v183, %v182
      %v199 = vpack.c.bf16 %v185, %v184
      %v200 = vpack.c.bf16 %v187, %v186
      %v201 = vpack.c.bf16 %v189, %v188
      %v202 = vpack.c.bf16 %v191, %v190
      %v203 = vpack.c.bf16 %v193, %v192
      %v204 = vpack.c.bf16 %v194, %v194
      %v205 = vld [vmem:[%s2] sm:$0x1]
      %v207 = vlaneseq
      %v208 = vshrl.u32 %v207, 7
      %v209 = vsub.s32 0, %v208
      %v210 = vrot.slane %v205, %v209
      %vm212 = vcmask 15360
      %v214 = vsel %vm212, %v195, 0
      %v217 = vsel %vm212, %v196, 0
      %v220 = vsel %vm212, %v197, 0
      %v223 = vsel %vm212, %v198, 0
      %v226 = vsel %vm212, %v199, 0
      %v229 = vsel %vm212, %v200, 0
      %v232 = vsel %vm212, %v201, 0
      %v235 = vsel %vm212, %v202, 0
      %v238 = vsel %vm212, %v203, 0
      %v241 = vsel %vm212, %v204, 0
      %vm243 = vcmask 1040384
      %v245 = vsel %vm243, %v175, 0
      %247 = vmatprep.subr.bf16.mxu0 0
      %248 = vmatpush1.bf16.msra.mxu0 %v245
      %249 = vmatprep.subr.bf16.mxu0 0
      %250 = vmatpush1.bf16.msra.mxu0 0
      %251 = vmatprep.subr.bf16.mxu0 0
      %252 = vmatpush1.bf16.msra.mxu0 0
      %253 = vmatprep.subr.bf16.mxu0 0
      %254 = vmatpush1.bf16.msra.mxu0 0
      %255 = vmatprep.subr.bf16.mxu0 0
      %256 = vmatpush1.bf16.msra.mxu0 0
      %257 = vmatprep.subr.bf16.mxu0 0
      %258 = vmatpush1.bf16.msra.mxu0 0
      %259 = vmatprep.subr.bf16.mxu0 0
      %260 = vmatpush1.bf16.msra.mxu0 0
      %261 = vmatprep.subr.bf16.mxu0 0
      %262 = vmatpush1.bf16.msra.mxu0 0
      %263 = vmatprep.subr.bf16.mxu0 0
      %264 = vmatpush1.bf16.msra.mxu0 0
      %265 = vmatprep.subr.bf16.mxu0 0
      %266 = vmatpush1.bf16.msra.mxu0 0
      %267 = vmatprep.subr.bf16.mxu0 0
      %268 = vmatpush1.bf16.msra.mxu0 0
      %269 = vmatprep.subr.bf16.mxu0 0
      %270 = vmatpush1.bf16.msra.mxu0 0
      %271 = vmatprep.subr.bf16.mxu0 0
      %272 = vmatpush1.bf16.msra.mxu0 0
      %273 = vmatprep.subr.bf16.mxu0 0
      %274 = vmatpush1.bf16.msra.mxu0 0
      %275 = vmatprep.subr.bf16.mxu0 0
      %276 = vmatpush1.bf16.msra.mxu0 0
      %277 = vmatprep.subr.bf16.mxu0 0
      %278 = vmatpush1.bf16.msra.mxu0 0
      %279 = vmatprep.mubr.bf16.mxu0 0
      %280 = vmatmul.mubr.bf16.gmra.mrb[0].mxu0 %v214
      %v281 = vpop.f32.mrb[0].mxu0
      %v282 = vadd.f32 %v210, %v281
      %v283 = vpop.f32.mrb[0].mxu0
      %v284 = vpop.f32.mrb[0].mxu0
      %v285 = vadd.f32 %v210, %v284
      %v286 = vpop.f32.mrb[0].mxu0
      %287 = vmatprep.mubr.bf16.mxu0 0
      %288 = vmatmul.mubr.bf16.gmra.mrb[0].mxu0 %v217
      %v289 = vpop.f32.mrb[0].mxu0
      %v290 = vadd.f32 %v210, %v289
      %v291 = vpop.f32.mrb[0].mxu0
      %v292 = vpop.f32.mrb[0].mxu0
      %v293 = vadd.f32 %v210, %v292
      %v294 = vpop.f32.mrb[0].mxu0
      %295 = vmatprep.mubr.bf16.mxu0 0
      %296 = vmatmul.mubr.bf16.gmra.mrb[0].mxu0 %v220
      %v297 = vpop.f32.mrb[0].mxu0
      %v298 = vadd.f32 %v210, %v297
      %v299 = vpop.f32.mrb[0].mxu0
      %v300 = vpop.f32.mrb[0].mxu0
      %v301 = vadd.f32 %v210, %v300
      %v302 = vpop.f32.mrb[0].mxu0
      %303 = vmatprep.mubr.bf16.mxu0 0
      %304 = vmatmul.mubr.bf16.gmra.mrb[0].mxu0 %v223
      %v305 = vpop.f32.mrb[0].mxu0
      %v306 = vadd.f32 %v210, %v305
      %v307 = vpop.f32.mrb[0].mxu0
      %v308 = vpop.f32.mrb[0].mxu0
      %v309 = vadd.f32 %v210, %v308
      %v310 = vpop.f32.mrb[0].mxu0
      %311 = vmatprep.mubr.bf16.mxu0 0
      %312 = vmatmul.mubr.bf16.gmra.mrb[0].mxu0 %v226
      %v313 = vpop.f32.mrb[0].mxu0
      %v314 = vadd.f32 %v210, %v313
      %v315 = vpop.f32.mrb[0].mxu0
      %v316 = vpop.f32.mrb[0].mxu0
      %v317 = vadd.f32 %v210, %v316
      %v318 = vpop.f32.mrb[0].mxu0
      %319 = vmatprep.mubr.bf16.mxu0 0
      %320 = vmatmul.mubr.bf16.gmra.mrb[0].mxu0 %v229
      %v321 = vpop.f32.mrb[0].mxu0
      %v322 = vadd.f32 %v210, %v321
      %v323 = vpop.f32.mrb[0].mxu0
      %v324 = vpop.f32.mrb[0].mxu0
      %v325 = vadd.f32 %v210, %v324
      %v326 = vpop.f32.mrb[0].mxu0
      %327 = vmatprep.mubr.bf16.mxu0 0
      %328 = vmatmul.mubr.bf16.gmra.mrb[0].mxu0 %v232
      %v329 = vpop.f32.mrb[0].mxu0
      %v330 = vadd.f32 %v210, %v329
      %v331 = vpop.f32.mrb[0].mxu0
      %v332 = vpop.f32.mrb[0].mxu0
      %v333 = vadd.f32 %v210, %v332
      %v334 = vpop.f32.mrb[0].mxu0
      %335 = vmatprep.mubr.bf16.mxu0 0
      %336 = vmatmul.mubr.bf16.gmra.mrb[0].mxu0 %v235
      %v337 = vpop.f32.mrb[0].mxu0
      %v338 = vadd.f32 %v210, %v337
      %v339 = vpop.f32.mrb[0].mxu0
      %v340 = vpop.f32.mrb[0].mxu0
      %v341 = vadd.f32 %v210, %v340
      %v342 = vpop.f32.mrb[0].mxu0
      %343 = vmatprep.mubr.bf16.mxu0 0
      %344 = vmatmul.mubr.bf16.gmra.mrb[0].mxu0 %v238
      %v345 = vpop.f32.mrb[0].mxu0
      %v346 = vadd.f32 %v210, %v345
      %v347 = vpop.f32.mrb[0].mxu0
      %v348 = vpop.f32.mrb[0].mxu0
      %v349 = vadd.f32 %v210, %v348
      %v350 = vpop.f32.mrb[0].mxu0
      %351 = vmatprep.mubr.bf16.mxu0 0
      %352 = vmatmul.mubr.bf16.gmra.mrb[0].mxu0 %v241
      %v353 = vpop.f32.mrb[0].mxu0
      %v354 = vadd.f32 %v210, %v353
      %v355 = vpop.f32.mrb[0].mxu0
      %v356 = vpop.f32.mrb[0].mxu0
      %v357 = vpop.f32.mrb[0].mxu0
      %358 = vdwg.mxu0
      %v359 = vand.u32 2147483647, %v282
      %vm360 = vcmp.le.f32.partialorder %v359, 0.7853982
      %vm361 = vcmp.lt.s32.totalorder %v282, 0
      %v362 = vand.u32 %v282, 2139095040
      %v363 = vshrl.u32 %v362, 23
      %v364 = vsub.s32 %v363, 127
      %v365 = vand.u32 2147483647, %v282
      %v366 = vand.u32 %v365, 8388607
      %v367 = vor.u32 %v366, 8388608
      %v368 = vsub.s32 0, %v367
      %v369 = vadd.s32 %v364, 1
      %vm370 = vcmp.gt.s32.totalorder %v369, 0
      %v371 = vsel %vm370, %v369, 0
      %v372 = vshrl.u32 %v371, 5
      %v373 = vand.u32 %v371, 31
      %v374 = vsub.s32 32, %v373
      %v375 = vshrl.u32 683565275, %v374
      %v376 = vshll.u32 683565275, %v373
      %v377 = vshrl.u32 2475754826, %v374
      %v378 = vor.u32 %v376, %v377
      %v379 = vshll.u32 2475754826, %v373
      %v380 = vshrl.u32 2131351028, %v374
      %v381 = vor.u32 %v379, %v380
      %v382 = vshll.u32 2131351028, %v373
      %v383 = vshrl.u32 2102212464, %v374
      %v384 = vor.u32 %v382, %v383
      %v385 = vshll.u32 2102212464, %v373
      %v386 = vshrl.u32 920167782, %v374
      %v387 = vor.u32 %v385, %v386
      %v388 = vshll.u32 920167782, %v373
      %v389 = vshrl.u32 1326507024, %v374
      %v390 = vor.u32 %v388, %v389
      %vm391 = vcmp.lt.s32.totalorder %v372, 1
      %vm392 = vcmp.lt.s32.totalorder %v372, 2
      %vm393 = vcmp.lt.s32.totalorder %v372, 3
      %vm394 = vcmp.lt.s32.totalorder %v372, 4
      %v395 = vsel %vm391, %v375, %v378
      %v396 = vsel %vm394, %v384, 2102212464
      %v397 = vsel %vm393, %v381, %v396
      %v398 = vsel %vm392, %v395, %v397
      %v399 = vsel %vm391, %v378, %v381
      %v400 = vsel %vm394, %v387, 920167782
      %v401 = vsel %vm393, %v384, %v400
      %v402 = vsel %vm392, %v399, %v401
      %v403 = vsel %vm391, %v381, %v384
      %v404 = vsel %vm394, %v390, 1326507024
      %v405 = vsel %vm393, %v387, %v404
      %v406 = vsel %vm392, %v403, %v405
      %v407 = vshll.u32 %v367, 8
      %v408 = vmul.u32.u64.compose %v407, %v406
      %v409 = vextract.low.u32 %v408
      %v410 = vextract.high.u32 %v408
      %v411 = vmul.u32.u64.compose %v407, %v402
      %v412 = vextract.low.u32 %v411
      %v413 = vextract.high.u32 %v411
      %v414 = vmul.u32 %v407, %v398
      %v415 = vadd.s32 %v410, %v412
      %vm416 = vc.u32 %v410, %v412
      %v417 = vadd.s32 %v413, 1
      %v418 = vsel %vm416, %v417, %v413
      %v419 = vadd.s32 %v414, %v418
      %v420 = vadd.s32 %v419, 536870912
      %v421 = vshrl.u32 %v420, 30
      %v422 = vshll.u32 %v421, 30
      %v423 = vsub.s32 %v419, %v422
      %vm424 = vcmp.lt.s32.totalorder %v423, 0
      %v425 = vsub.s32 0, %v423
      %v426 = vsel %vm424, %v425, %v423
      %v427 = vclz %v426
      %v428 = vsub.s32 %v427, 2
      %vm429 = vcmp.gt.s32.totalorder 0, %v428
      %v430 = vsel %vm429, 0, %v428
      %v431 = vsub.s32 32, %v430
      %v432 = vshll.u32 %v423, %v430
      %v433 = vshrl.u32 %v415, %v431
      %v434 = vor.u32 %v432, %v433
      %v435 = vsub.s32 4294967266, %v430
      %v436 = vadd.s32 %v435, 127
      %v437 = vshll.u32 %v436, 23
      %v438 = vor.u32 4788187, %v437
      %v439 = vand.u32 2147483647, %v438
      %v441 = vcvt.s32.f32 %v434
      %v442 = vmul.f32 %v441, %v439
      %v443 = vxor.u32 %v442, 2147483648
      %v444 = vsel %vm361, %v443, %v442
      %v445 = vsub.s32 4, %v421
      %v446 = vsel %vm361, %v445, %v421
      %v447 = vsel %vm360, %v282, %v444
      %v448 = vsel %vm360, 0, %v446
      %v449 = vcosq.f32.pop %v447
      %v450 = vsinq.f32.pop %v447
      %vm451 = vweird.f32 %v282
      %v452 = vadd.s32 %v448, 3
      %v453 = vand.u32 %v452, 3
      %vm454 = vcmp.lt.s32.totalorder %v453, 2
      %vm455 = vcmp.eq.s32.totalorder %v453, 0
      %v456 = vxor.u32 %v450, 2147483648
      %v457 = vsel %vm455, %v449, %v456
      %vm458 = vcmp.eq.s32.totalorder %v453, 2
      %v459 = vxor.u32 %v449, 2147483648
      %v460 = vsel %vm458, %v459, %v450
      %v461 = vsel %vm454, %v457, %v460
      %v462 = vsel %vm451, nan, %v461
      %v463 = vand.u32 2147483647, %v285
      %vm464 = vcmp.le.f32.partialorder %v463, 0.7853982
      %vm465 = vcmp.lt.s32.totalorder %v285, 0
      %v466 = vand.u32 %v285, 2139095040
      %v467 = vshrl.u32 %v466, 23
      %v468 = vsub.s32 %v467, 127
      %v469 = vand.u32 2147483647, %v285
      %v470 = vand.u32 %v469, 8388607
      %v471 = vor.u32 %v470, 8388608
      %v472 = vsub.s32 0, %v471
      %v473 = vadd.s32 %v468, 1
      %vm474 = vcmp.gt.s32.totalorder %v473, 0
      %v475 = vsel %vm474, %v473, 0
      %v476 = vshrl.u32 %v475, 5
      %v477 = vand.u32 %v475, 31
      %v478 = vsub.s32 32, %v477
      %v479 = vshrl.u32 683565275, %v478
      %v480 = vshll.u32 683565275, %v477
      %v481 = vshrl.u32 2475754826, %v478
      %v482 = vor.u32 %v480, %v481
      %v483 = vshll.u32 2475754826, %v477
      %v484 = vshrl.u32 2131351028, %v478
      %v485 = vor.u32 %v483, %v484
      %v486 = vshll.u32 2131351028, %v477
      %v487 = vshrl.u32 2102212464, %v478
      %v488 = vor.u32 %v486, %v487
      %v489 = vshll.u32 2102212464, %v477
      %v490 = vshrl.u32 920167782, %v478
      %v491 = vor.u32 %v489, %v490
      %v492 = vshll.u32 920167782, %v477
      %v493 = vshrl.u32 1326507024, %v478
      %v494 = vor.u32 %v492, %v493
      %vm495 = vcmp.lt.s32.totalorder %v476, 1
      %vm496 = vcmp.lt.s32.totalorder %v476, 2
      %vm497 = vcmp.lt.s32.totalorder %v476, 3
      %vm498 = vcmp.lt.s32.totalorder %v476, 4
      %v499 = vsel %vm495, %v479, %v482
      %v500 = vsel %vm498, %v488, 2102212464
      %v501 = vsel %vm497, %v485, %v500
      %v502 = vsel %vm496, %v499, %v501
      %v503 = vsel %vm495, %v482, %v485
      %v504 = vsel %vm498, %v491, 920167782
      %v505 = vsel %vm497, %v488, %v504
      %v506 = vsel %vm496, %v503, %v505
      %v507 = vsel %vm495, %v485, %v488
      %v508 = vsel %vm498, %v494, 1326507024
      %v509 = vsel %vm497, %v491, %v508
      %v510 = vsel %vm496, %v507, %v509
      %v511 = vshll.u32 %v471, 8
      %v512 = vmul.u32.u64.compose %v511, %v510
      %v513 = vextract.low.u32 %v512
      %v514 = vextract.high.u32 %v512
      %v515 = vmul.u32.u64.compose %v511, %v506
      %v516 = vextract.low.u32 %v515
      %v517 = vextract.high.u32 %v515
      %v518 = vmul.u32 %v511, %v502
      %v519 = vadd.s32 %v514, %v516
      %vm520 = vc.u32 %v514, %v516
      %v521 = vadd.s32 %v517, 1
      %v522 = vsel %vm520, %v521, %v517
      %v523 = vadd.s32 %v518, %v522
      %v524 = vadd.s32 %v523, 536870912
      %v525 = vshrl.u32 %v524, 30
      %v526 = vshll.u32 %v525, 30
      %v527 = vsub.s32 %v523, %v526
      %vm528 = vcmp.lt.s32.totalorder %v527, 0
      %v529 = vsub.s32 0, %v527
      %v530 = vsel %vm528, %v529, %v527
      %v531 = vclz %v530
      %v532 = vsub.s32 %v531, 2
      %vm533 = vcmp.gt.s32.totalorder 0, %v532
      %v534 = vsel %vm533, 0, %v532
      %v535 = vsub.s32 32, %v534
      %v536 = vshll.u32 %v527, %v534
      %v537 = vshrl.u32 %v519, %v535
      %v538 = vor.u32 %v536, %v537
      %v539 = vsub.s32 4294967266, %v534
      %v540 = vadd.s32 %v539, 127
      %v541 = vshll.u32 %v540, 23
      %v542 = vor.u32 4788187, %v541
      %v543 = vand.u32 2147483647, %v542
      %v545 = vcvt.s32.f32 %v538
      %v546 = vmul.f32 %v545, %v543
      %v547 = vxor.u32 %v546, 2147483648
      %v548 = vsel %vm465, %v547, %v546
      %v549 = vsub.s32 4, %v525
      %v550 = vsel %vm465, %v549, %v525
      %v551 = vsel %vm464, %v285, %v548
      %v552 = vsel %vm464, 0, %v550
      %v553 = vcosq.f32.pop %v551
      %v554 = vsinq.f32.pop %v551
      %vm555 = vweird.f32 %v285
      %v556 = vadd.s32 %v552, 3
      %v557 = vand.u32 %v556, 3
      %vm558 = vcmp.lt.s32.totalorder %v557, 2
      %vm559 = vcmp.eq.s32.totalorder %v557, 0
      %v560 = vxor.u32 %v554, 2147483648
      %v561 = vsel %vm559, %v553, %v560
      %vm562 = vcmp.eq.s32.totalorder %v557, 2
      %v563 = vxor.u32 %v553, 2147483648
      %v564 = vsel %vm562, %v563, %v554
      %v565 = vsel %vm558, %v561, %v564
      %v566 = vsel %vm555, nan, %v565
      %v567 = vand.u32 2147483647, %v290
      %vm568 = vcmp.le.f32.partialorder %v567, 0.7853982
      %vm569 = vcmp.lt.s32.totalorder %v290, 0
      %v570 = vand.u32 %v290, 2139095040
      %v571 = vshrl.u32 %v570, 23
      %v572 = vsub.s32 %v571, 127
      %v573 = vand.u32 2147483647, %v290
      %v574 = vand.u32 %v573, 8388607
      %v575 = vor.u32 %v574, 8388608
      %v576 = vsub.s32 0, %v575
      %v577 = vadd.s32 %v572, 1
      %vm578 = vcmp.gt.s32.totalorder %v577, 0
      %v579 = vsel %vm578, %v577, 0
      %v580 = vshrl.u32 %v579, 5
      %v581 = vand.u32 %v579, 31
      %v582 = vsub.s32 32, %v581
      %v583 = vshrl.u32 683565275, %v582
      %v584 = vshll.u32 683565275, %v581
      %v585 = vshrl.u32 2475754826, %v582
      %v586 = vor.u32 %v584, %v585
      %v587 = vshll.u32 2475754826, %v581
      %v588 = vshrl.u32 2131351028, %v582
      %v589 = vor.u32 %v587, %v588
      %v590 = vshll.u32 2131351028, %v581
      %v591 = vshrl.u32 2102212464, %v582
      %v592 = vor.u32 %v590, %v591
      %v593 = vshll.u32 2102212464, %v581
      %v594 = vshrl.u32 920167782, %v582
      %v595 = vor.u32 %v593, %v594
      %v596 = vshll.u32 920167782, %v581
      %v597 = vshrl.u32 1326507024, %v582
      %v598 = vor.u32 %v596, %v597
      %vm599 = vcmp.lt.s32.totalorder %v580, 1
      %vm600 = vcmp.lt.s32.totalorder %v580, 2
      %vm601 = vcmp.lt.s32.totalorder %v580, 3
      %vm602 = vcmp.lt.s32.totalorder %v580, 4
      %v603 = vsel %vm599, %v583, %v586
      %v604 = vsel %vm602, %v592, 2102212464
      %v605 = vsel %vm601, %v589, %v604
      %v606 = vsel %vm600, %v603, %v605
      %v607 = vsel %vm599, %v586, %v589
      %v608 = vsel %vm602, %v595, 920167782
      %v609 = vsel %vm601, %v592, %v608
      %v610 = vsel %vm600, %v607, %v609
      %v611 = vsel %vm599, %v589, %v592
      %v612 = vsel %vm602, %v598, 1326507024
      %v613 = vsel %vm601, %v595, %v612
      %v614 = vsel %vm600, %v611, %v613
      %v615 = vshll.u32 %v575, 8
      %v616 = vmul.u32.u64.compose %v615, %v614
      %v617 = vextract.low.u32 %v616
      %v618 = vextract.high.u32 %v616
      %v619 = vmul.u32.u64.compose %v615, %v610
      %v620 = vextract.low.u32 %v619
      %v621 = vextract.high.u32 %v619
      %v622 = vmul.u32 %v615, %v606
      %v623 = vadd.s32 %v618, %v620
      %vm624 = vc.u32 %v618, %v620
      %v625 = vadd.s32 %v621, 1
      %v626 = vsel %vm624, %v625, %v621
      %v627 = vadd.s32 %v622, %v626
      %v628 = vadd.s32 %v627, 536870912
      %v629 = vshrl.u32 %v628, 30
      %v630 = vshll.u32 %v629, 30
      %v631 = vsub.s32 %v627, %v630
      %vm632 = vcmp.lt.s32.totalorder %v631, 0
      %v633 = vsub.s32 0, %v631
      %v634 = vsel %vm632, %v633, %v631
      %v635 = vclz %v634
      %v636 = vsub.s32 %v635, 2
      %vm637 = vcmp.gt.s32.totalorder 0, %v636
      %v638 = vsel %vm637, 0, %v636
      %v639 = vsub.s32 32, %v638
      %v640 = vshll.u32 %v631, %v638
      %v641 = vshrl.u32 %v623, %v639
      %v642 = vor.u32 %v640, %v641
      %v643 = vsub.s32 4294967266, %v638
      %v644 = vadd.s32 %v643, 127
      %v645 = vshll.u32 %v644, 23
      %v646 = vor.u32 4788187, %v645
      %v647 = vand.u32 2147483647, %v646
      %v649 = vcvt.s32.f32 %v642
      %v650 = vmul.f32 %v649, %v647
      %v651 = vxor.u32 %v650, 2147483648
      %v652 = vsel %vm569, %v651, %v650
      %v653 = vsub.s32 4, %v629
      %v654 = vsel %vm569, %v653, %v629
      %v655 = vsel %vm568, %v290, %v652
      %v656 = vsel %vm568, 0, %v654
      %v657 = vcosq.f32.pop %v655
      %v658 = vsinq.f32.pop %v655
      %vm659 = vweird.f32 %v290
      %v660 = vadd.s32 %v656, 3
      %v661 = vand.u32 %v660, 3
      %vm662 = vcmp.lt.s32.totalorder %v661, 2
      %vm663 = vcmp.eq.s32.totalorder %v661, 0
      %v664 = vxor.u32 %v658, 2147483648
      %v665 = vsel %vm663, %v657, %v664
      %vm666 = vcmp.eq.s32.totalorder %v661, 2
      %v667 = vxor.u32 %v657, 2147483648
      %v668 = vsel %vm666, %v667, %v658
      %v669 = vsel %vm662, %v665, %v668
      %v670 = vsel %vm659, nan, %v669
      %v671 = vand.u32 2147483647, %v293
      %vm672 = vcmp.le.f32.partialorder %v671, 0.7853982
      %vm673 = vcmp.lt.s32.totalorder %v293, 0
      %v674 = vand.u32 %v293, 2139095040
      %v675 = vshrl.u32 %v674, 23
      %v676 = vsub.s32 %v675, 127
      %v677 = vand.u32 2147483647, %v293
      %v678 = vand.u32 %v677, 8388607
      %v679 = vor.u32 %v678, 8388608
      %v680 = vsub.s32 0, %v679
      %v681 = vadd.s32 %v676, 1
      %vm682 = vcmp.gt.s32.totalorder %v681, 0
      %v683 = vsel %vm682, %v681, 0
      %v684 = vshrl.u32 %v683, 5
      %v685 = vand.u32 %v683, 31
      %v686 = vsub.s32 32, %v685
      %v687 = vshrl.u32 683565275, %v686
      %v688 = vshll.u32 683565275, %v685
      %v689 = vshrl.u32 2475754826, %v686
      %v690 = vor.u32 %v688, %v689
      %v691 = vshll.u32 2475754826, %v685
      %v692 = vshrl.u32 2131351028, %v686
      %v693 = vor.u32 %v691, %v692
      %v694 = vshll.u32 2131351028, %v685
      %v695 = vshrl.u32 2102212464, %v686
      %v696 = vor.u32 %v694, %v695
      %v697 = vshll.u32 2102212464, %v685
      %v698 = vshrl.u32 920167782, %v686
      %v699 = vor.u32 %v697, %v698
      %v700 = vshll.u32 920167782, %v685
      %v701 = vshrl.u32 1326507024, %v686
      %v702 = vor.u32 %v700, %v701
      %vm703 = vcmp.lt.s32.totalorder %v684, 1
      %vm704 = vcmp.lt.s32.totalorder %v684, 2
      %vm705 = vcmp.lt.s32.totalorder %v684, 3
      %vm706 = vcmp.lt.s32.totalorder %v684, 4
      %v707 = vsel %vm703, %v687, %v690
      %v708 = vsel %vm706, %v696, 2102212464
      %v709 = vsel %vm705, %v693, %v708
      %v710 = vsel %vm704, %v707, %v709
      %v711 = vsel %vm703, %v690, %v693
      %v712 = vsel %vm706, %v699, 920167782
      %v713 = vsel %vm705, %v696, %v712
      %v714 = vsel %vm704, %v711, %v713
      %v715 = vsel %vm703, %v693, %v696
      %v716 = vsel %vm706, %v702, 1326507024
      %v717 = vsel %vm705, %v699, %v716
      %v718 = vsel %vm704, %v715, %v717
      %v719 = vshll.u32 %v679, 8
      %v720 = vmul.u32.u64.compose %v719, %v718
      %v721 = vextract.low.u32 %v720
      %v722 = vextract.high.u32 %v720
      %v723 = vmul.u32.u64.compose %v719, %v714
      %v724 = vextract.low.u32 %v723
      %v725 = vextract.high.u32 %v723
      %v726 = vmul.u32 %v719, %v710
      %v727 = vadd.s32 %v722, %v724
      %vm728 = vc.u32 %v722, %v724
      %v729 = vadd.s32 %v725, 1
      %v730 = vsel %vm728, %v729, %v725
      %v731 = vadd.s32 %v726, %v730
      %v732 = vadd.s32 %v731, 536870912
      %v733 = vshrl.u32 %v732, 30
      %v734 = vshll.u32 %v733, 30
      %v735 = vsub.s32 %v731, %v734
      %vm736 = vcmp.lt.s32.totalorder %v735, 0
      %v737 = vsub.s32 0, %v735
      %v738 = vsel %vm736, %v737, %v735
      %v739 = vclz %v738
      %v740 = vsub.s32 %v739, 2
      %vm741 = vcmp.gt.s32.totalorder 0, %v740
      %v742 = vsel %vm741, 0, %v740
      %v743 = vsub.s32 32, %v742
      %v744 = vshll.u32 %v735, %v742
      %v745 = vshrl.u32 %v727, %v743
      %v746 = vor.u32 %v744, %v745
      %v747 = vsub.s32 4294967266, %v742
      %v748 = vadd.s32 %v747, 127
      %v749 = vshll.u32 %v748, 23
      %v750 = vor.u32 4788187, %v749
      %v751 = vand.u32 2147483647, %v750
      %v753 = vcvt.s32.f32 %v746
      %v754 = vmul.f32 %v753, %v751
      %v755 = vxor.u32 %v754, 2147483648
      %v756 = vsel %vm673, %v755, %v754
      %v757 = vsub.s32 4, %v733
      %v758 = vsel %vm673, %v757, %v733
      %v759 = vsel %vm672, %v293, %v756
      %v760 = vsel %vm672, 0, %v758
      %v761 = vcosq.f32.pop %v759
      %v762 = vsinq.f32.pop %v759
      %vm763 = vweird.f32 %v293
      %v764 = vadd.s32 %v760, 3
      %v765 = vand.u32 %v764, 3
      %vm766 = vcmp.lt.s32.totalorder %v765, 2
      %vm767 = vcmp.eq.s32.totalorder %v765, 0
      %v768 = vxor.u32 %v762, 2147483648
      %v769 = vsel %vm767, %v761, %v768
      %vm770 = vcmp.eq.s32.totalorder %v765, 2
      %v771 = vxor.u32 %v761, 2147483648
      %v772 = vsel %vm770, %v771, %v762
      %v773 = vsel %vm766, %v769, %v772
      %v774 = vsel %vm763, nan, %v773
      %v775 = vand.u32 2147483647, %v298
      %vm776 = vcmp.le.f32.partialorder %v775, 0.7853982
      %vm777 = vcmp.lt.s32.totalorder %v298, 0
      %v778 = vand.u32 %v298, 2139095040
      %v779 = vshrl.u32 %v778, 23
      %v780 = vsub.s32 %v779, 127
      %v781 = vand.u32 2147483647, %v298
      %v782 = vand.u32 %v781, 8388607
      %v783 = vor.u32 %v782, 8388608
      %v784 = vsub.s32 0, %v783
      %v785 = vadd.s32 %v780, 1
      %vm786 = vcmp.gt.s32.totalorder %v785, 0
      %v787 = vsel %vm786, %v785, 0
      %v788 = vshrl.u32 %v787, 5
      %v789 = vand.u32 %v787, 31
      %v790 = vsub.s32 32, %v789
      %v791 = vshrl.u32 683565275, %v790
      %v792 = vshll.u32 683565275, %v789
      %v793 = vshrl.u32 2475754826, %v790
      %v794 = vor.u32 %v792, %v793
      %v795 = vshll.u32 2475754826, %v789
      %v796 = vshrl.u32 2131351028, %v790
      %v797 = vor.u32 %v795, %v796
      %v798 = vshll.u32 2131351028, %v789
      %v799 = vshrl.u32 2102212464, %v790
      %v800 = vor.u32 %v798, %v799
      %v801 = vshll.u32 2102212464, %v789
      %v802 = vshrl.u32 920167782, %v790
      %v803 = vor.u32 %v801, %v802
      %v804 = vshll.u32 920167782, %v789
      %v805 = vshrl.u32 1326507024, %v790
      %v806 = vor.u32 %v804, %v805
      %vm807 = vcmp.lt.s32.totalorder %v788, 1
      %vm808 = vcmp.lt.s32.totalorder %v788, 2
      %vm809 = vcmp.lt.s32.totalorder %v788, 3
      %vm810 = vcmp.lt.s32.totalorder %v788, 4
      %v811 = vsel %vm807, %v791, %v794
      %v812 = vsel %vm810, %v800, 2102212464
      %v813 = vsel %vm809, %v797, %v812
      %v814 = vsel %vm808, %v811, %v813
      %v815 = vsel %vm807, %v794, %v797
      %v816 = vsel %vm810, %v803, 920167782
      %v817 = vsel %vm809, %v800, %v816
      %v818 = vsel %vm808, %v815, %v817
      %v819 = vsel %vm807, %v797, %v800
      %v820 = vsel %vm810, %v806, 1326507024
      %v821 = vsel %vm809, %v803, %v820
      %v822 = vsel %vm808, %v819, %v821
      %v823 = vshll.u32 %v783, 8
      %v824 = vmul.u32.u64.compose %v823, %v822
      %v825 = vextract.low.u32 %v824
      %v826 = vextract.high.u32 %v824
      %v827 = vmul.u32.u64.compose %v823, %v818
      %v828 = vextract.low.u32 %v827
      %v829 = vextract.high.u32 %v827
      %v830 = vmul.u32 %v823, %v814
      %v831 = vadd.s32 %v826, %v828
      %vm832 = vc.u32 %v826, %v828
      %v833 = vadd.s32 %v829, 1
      %v834 = vsel %vm832, %v833, %v829
      %v835 = vadd.s32 %v830, %v834
      %v836 = vadd.s32 %v835, 536870912
      %v837 = vshrl.u32 %v836, 30
      %v838 = vshll.u32 %v837, 30
      %v839 = vsub.s32 %v835, %v838
      %vm840 = vcmp.lt.s32.totalorder %v839, 0
      %v841 = vsub.s32 0, %v839
      %v842 = vsel %vm840, %v841, %v839
      %v843 = vclz %v842
      %v844 = vsub.s32 %v843, 2
      %vm845 = vcmp.gt.s32.totalorder 0, %v844
      %v846 = vsel %vm845, 0, %v844
      %v847 = vsub.s32 32, %v846
      %v848 = vshll.u32 %v839, %v846
      %v849 = vshrl.u32 %v831, %v847
      %v850 = vor.u32 %v848, %v849
      %v851 = vsub.s32 4294967266, %v846
      %v852 = vadd.s32 %v851, 127
      %v853 = vshll.u32 %v852, 23
      %v854 = vor.u32 4788187, %v853
      %v855 = vand.u32 2147483647, %v854
      %v857 = vcvt.s32.f32 %v850
      %v858 = vmul.f32 %v857, %v855
      %v859 = vxor.u32 %v858, 2147483648
      %v860 = vsel %vm777, %v859, %v858
      %v861 = vsub.s32 4, %v837
      %v862 = vsel %vm777, %v861, %v837
      %v863 = vsel %vm776, %v298, %v860
      %v864 = vsel %vm776, 0, %v862
      %v865 = vcosq.f32.pop %v863
      %v866 = vsinq.f32.pop %v863
      %vm867 = vweird.f32 %v298
      %v868 = vadd.s32 %v864, 3
      %v869 = vand.u32 %v868, 3
      %vm870 = vcmp.lt.s32.totalorder %v869, 2
      %vm871 = vcmp.eq.s32.totalorder %v869, 0
      %v872 = vxor.u32 %v866, 2147483648
      %v873 = vsel %vm871, %v865, %v872
      %vm874 = vcmp.eq.s32.totalorder %v869, 2
      %v875 = vxor.u32 %v865, 2147483648
      %v876 = vsel %vm874, %v875, %v866
      %v877 = vsel %vm870, %v873, %v876
      %v878 = vsel %vm867, nan, %v877
      %v879 = vand.u32 2147483647, %v301
      %vm880 = vcmp.le.f32.partialorder %v879, 0.7853982
      %vm881 = vcmp.lt.s32.totalorder %v301, 0
      %v882 = vand.u32 %v301, 2139095040
      %v883 = vshrl.u32 %v882, 23
      %v884 = vsub.s32 %v883, 127
      %v885 = vand.u32 2147483647, %v301
      %v886 = vand.u32 %v885, 8388607
      %v887 = vor.u32 %v886, 8388608
      %v888 = vsub.s32 0, %v887
      %v889 = vadd.s32 %v884, 1
      %vm890 = vcmp.gt.s32.totalorder %v889, 0
      %v891 = vsel %vm890, %v889, 0
      %v892 = vshrl.u32 %v891, 5
      %v893 = vand.u32 %v891, 31
      %v894 = vsub.s32 32, %v893
      %v895 = vshrl.u32 683565275, %v894
      %v896 = vshll.u32 683565275, %v893
      %v897 = vshrl.u32 2475754826, %v894
      %v898 = vor.u32 %v896, %v897
      %v899 = vshll.u32 2475754826, %v893
      %v900 = vshrl.u32 2131351028, %v894
      %v901 = vor.u32 %v899, %v900
      %v902 = vshll.u32 2131351028, %v893
      %v903 = vshrl.u32 2102212464, %v894
      %v904 = vor.u32 %v902, %v903
      %v905 = vshll.u32 2102212464, %v893
      %v906 = vshrl.u32 920167782, %v894
      %v907 = vor.u32 %v905, %v906
      %v908 = vshll.u32 920167782, %v893
      %v909 = vshrl.u32 1326507024, %v894
      %v910 = vor.u32 %v908, %v909
      %vm911 = vcmp.lt.s32.totalorder %v892, 1
      %vm912 = vcmp.lt.s32.totalorder %v892, 2
      %vm913 = vcmp.lt.s32.totalorder %v892, 3
      %vm914 = vcmp.lt.s32.totalorder %v892, 4
      %v915 = vsel %vm911, %v895, %v898
      %v916 = vsel %vm914, %v904, 2102212464
      %v917 = vsel %vm913, %v901, %v916
      %v918 = vsel %vm912, %v915, %v917
      %v919 = vsel %vm911, %v898, %v901
      %v920 = vsel %vm914, %v907, 920167782
      %v921 = vsel %vm913, %v904, %v920
      %v922 = vsel %vm912, %v919, %v921
      %v923 = vsel %vm911, %v901, %v904
      %v924 = vsel %vm914, %v910, 1326507024
      %v925 = vsel %vm913, %v907, %v924
      %v926 = vsel %vm912, %v923, %v925
      %v927 = vshll.u32 %v887, 8
      %v928 = vmul.u32.u64.compose %v927, %v926
      %v929 = vextract.low.u32 %v928
      %v930 = vextract.high.u32 %v928
      %v931 = vmul.u32.u64.compose %v927, %v922
      %v932 = vextract.low.u32 %v931
      %v933 = vextract.high.u32 %v931
      %v934 = vmul.u32 %v927, %v918
      %v935 = vadd.s32 %v930, %v932
      %vm936 = vc.u32 %v930, %v932
      %v937 = vadd.s32 %v933, 1
      %v938 = vsel %vm936, %v937, %v933
      %v939 = vadd.s32 %v934, %v938
      %v940 = vadd.s32 %v939, 536870912
      %v941 = vshrl.u32 %v940, 30
      %v942 = vshll.u32 %v941, 30
      %v943 = vsub.s32 %v939, %v942
      %vm944 = vcmp.lt.s32.totalorder %v943, 0
      %v945 = vsub.s32 0, %v943
      %v946 = vsel %vm944, %v945, %v943
      %v947 = vclz %v946
      %v948 = vsub.s32 %v947, 2
      %vm949 = vcmp.gt.s32.totalorder 0, %v948
      %v950 = vsel %vm949, 0, %v948
      %v951 = vsub.s32 32, %v950
      %v952 = vshll.u32 %v943, %v950
      %v953 = vshrl.u32 %v935, %v951
      %v954 = vor.u32 %v952, %v953
      %v955 = vsub.s32 4294967266, %v950
      %v956 = vadd.s32 %v955, 127
      %v957 = vshll.u32 %v956, 23
      %v958 = vor.u32 4788187, %v957
      %v959 = vand.u32 2147483647, %v958
      %v961 = vcvt.s32.f32 %v954
      %v962 = vmul.f32 %v961, %v959
      %v963 = vxor.u32 %v962, 2147483648
      %v964 = vsel %vm881, %v963, %v962
      %v965 = vsub.s32 4, %v941
      %v966 = vsel %vm881, %v965, %v941
      %v967 = vsel %vm880, %v301, %v964
      %v968 = vsel %vm880, 0, %v966
      %v969 = vcosq.f32.pop %v967
      %v970 = vsinq.f32.pop %v967
      %vm971 = vweird.f32 %v301
      %v972 = vadd.s32 %v968, 3
      %v973 = vand.u32 %v972, 3
      %vm974 = vcmp.lt.s32.totalorder %v973, 2
      %vm975 = vcmp.eq.s32.totalorder %v973, 0
      %v976 = vxor.u32 %v970, 2147483648
      %v977 = vsel %vm975, %v969, %v976
      %vm978 = vcmp.eq.s32.totalorder %v973, 2
      %v979 = vxor.u32 %v969, 2147483648
      %v980 = vsel %vm978, %v979, %v970
      %v981 = vsel %vm974, %v977, %v980
      %v982 = vsel %vm971, nan, %v981
      %v983 = vand.u32 2147483647, %v306
      %vm984 = vcmp.le.f32.partialorder %v983, 0.7853982
      %vm985 = vcmp.lt.s32.totalorder %v306, 0
      %v986 = vand.u32 %v306, 2139095040
      %v987 = vshrl.u32 %v986, 23
      %v988 = vsub.s32 %v987, 127
      %v989 = vand.u32 2147483647, %v306
      %v990 = vand.u32 %v989, 8388607
      %v991 = vor.u32 %v990, 8388608
      %v992 = vsub.s32 0, %v991
      %v993 = vadd.s32 %v988, 1
      %vm994 = vcmp.gt.s32.totalorder %v993, 0
      %v995 = vsel %vm994, %v993, 0
      %v996 = vshrl.u32 %v995, 5
      %v997 = vand.u32 %v995, 31
      %v998 = vsub.s32 32, %v997
      %v999 = vshrl.u32 683565275, %v998
      %v1000 = vshll.u32 683565275, %v997
      %v1001 = vshrl.u32 2475754826, %v998
      %v1002 = vor.u32 %v1000, %v1001
      %v1003 = vshll.u32 2475754826, %v997
      %v1004 = vshrl.u32 2131351028, %v998
      %v1005 = vor.u32 %v1003, %v1004
      %v1006 = vshll.u32 2131351028, %v997
      %v1007 = vshrl.u32 2102212464, %v998
      %v1008 = vor.u32 %v1006, %v1007
      %v1009 = vshll.u32 2102212464, %v997
      %v1010 = vshrl.u32 920167782, %v998
      %v1011 = vor.u32 %v1009, %v1010
      %v1012 = vshll.u32 920167782, %v997
      %v1013 = vshrl.u32 1326507024, %v998
      %v1014 = vor.u32 %v1012, %v1013
      %vm1015 = vcmp.lt.s32.totalorder %v996, 1
      %vm1016 = vcmp.lt.s32.totalorder %v996, 2
      %vm1017 = vcmp.lt.s32.totalorder %v996, 3
      %vm1018 = vcmp.lt.s32.totalorder %v996, 4
      %v1019 = vsel %vm1015, %v999, %v1002
      %v1020 = vsel %vm1018, %v1008, 2102212464
      %v1021 = vsel %vm1017, %v1005, %v1020
      %v1022 = vsel %vm1016, %v1019, %v1021
      %v1023 = vsel %vm1015, %v1002, %v1005
      %v1024 = vsel %vm1018, %v1011, 920167782
      %v1025 = vsel %vm1017, %v1008, %v1024
      %v1026 = vsel %vm1016, %v1023, %v1025
      %v1027 = vsel %vm1015, %v1005, %v1008
      %v1028 = vsel %vm1018, %v1014, 1326507024
      %v1029 = vsel %vm1017, %v1011, %v1028
      %v1030 = vsel %vm1016, %v1027, %v1029
      %v1031 = vshll.u32 %v991, 8
      %v1032 = vmul.u32.u64.compose %v1031, %v1030
      %v1033 = vextract.low.u32 %v1032
      %v1034 = vextract.high.u32 %v1032
      %v1035 = vmul.u32.u64.compose %v1031, %v1026
      %v1036 = vextract.low.u32 %v1035
      %v1037 = vextract.high.u32 %v1035
      %v1038 = vmul.u32 %v1031, %v1022
      %v1039 = vadd.s32 %v1034, %v1036
      %vm1040 = vc.u32 %v1034, %v1036
      %v1041 = vadd.s32 %v1037, 1
      %v1042 = vsel %vm1040, %v1041, %v1037
      %v1043 = vadd.s32 %v1038, %v1042
      %v1044 = vadd.s32 %v1043, 536870912
      %v1045 = vshrl.u32 %v1044, 30
      %v1046 = vshll.u32 %v1045, 30
      %v1047 = vsub.s32 %v1043, %v1046
      %vm1048 = vcmp.lt.s32.totalorder %v1047, 0
      %v1049 = vsub.s32 0, %v1047
      %v1050 = vsel %vm1048, %v1049, %v1047
      %v1051 = vclz %v1050
      %v1052 = vsub.s32 %v1051, 2
      %vm1053 = vcmp.gt.s32.totalorder 0, %v1052
      %v1054 = vsel %vm1053, 0, %v1052
      %v1055 = vsub.s32 32, %v1054
      %v1056 = vshll.u32 %v1047, %v1054
      %v1057 = vshrl.u32 %v1039, %v1055
      %v1058 = vor.u32 %v1056, %v1057
      %v1059 = vsub.s32 4294967266, %v1054
      %v1060 = vadd.s32 %v1059, 127
      %v1061 = vshll.u32 %v1060, 23
      %v1062 = vor.u32 4788187, %v1061
      %v1063 = vand.u32 2147483647, %v1062
      %v1065 = vcvt.s32.f32 %v1058
      %v1066 = vmul.f32 %v1065, %v1063
      %v1067 = vxor.u32 %v1066, 2147483648
      %v1068 = vsel %vm985, %v1067, %v1066
      %v1069 = vsub.s32 4, %v1045
      %v1070 = vsel %vm985, %v1069, %v1045
      %v1071 = vsel %vm984, %v306, %v1068
      %v1072 = vsel %vm984, 0, %v1070
      %v1073 = vcosq.f32.pop %v1071
      %v1074 = vsinq.f32.pop %v1071
      %vm1075 = vweird.f32 %v306
      %v1076 = vadd.s32 %v1072, 3
      %v1077 = vand.u32 %v1076, 3
      %vm1078 = vcmp.lt.s32.totalorder %v1077, 2
      %vm1079 = vcmp.eq.s32.totalorder %v1077, 0
      %v1080 = vxor.u32 %v1074, 2147483648
      %v1081 = vsel %vm1079, %v1073, %v1080
      %vm1082 = vcmp.eq.s32.totalorder %v1077, 2
      %v1083 = vxor.u32 %v1073, 2147483648
      %v1084 = vsel %vm1082, %v1083, %v1074
      %v1085 = vsel %vm1078, %v1081, %v1084
      %v1086 = vsel %vm1075, nan, %v1085
      %v1087 = vand.u32 2147483647, %v309
      %vm1088 = vcmp.le.f32.partialorder %v1087, 0.7853982
      %vm1089 = vcmp.lt.s32.totalorder %v309, 0
      %v1090 = vand.u32 %v309, 2139095040
      %v1091 = vshrl.u32 %v1090, 23
      %v1092 = vsub.s32 %v1091, 127
      %v1093 = vand.u32 2147483647, %v309
      %v1094 = vand.u32 %v1093, 8388607
      %v1095 = vor.u32 %v1094, 8388608
      %v1096 = vsub.s32 0, %v1095
      %v1097 = vadd.s32 %v1092, 1
      %vm1098 = vcmp.gt.s32.totalorder %v1097, 0
      %v1099 = vsel %vm1098, %v1097, 0
      %v1100 = vshrl.u32 %v1099, 5
      %v1101 = vand.u32 %v1099, 31
      %v1102 = vsub.s32 32, %v1101
      %v1103 = vshrl.u32 683565275, %v1102
      %v1104 = vshll.u32 683565275, %v1101
      %v1105 = vshrl.u32 2475754826, %v1102
      %v1106 = vor.u32 %v1104, %v1105
      %v1107 = vshll.u32 2475754826, %v1101
      %v1108 = vshrl.u32 2131351028, %v1102
      %v1109 = vor.u32 %v1107, %v1108
      %v1110 = vshll.u32 2131351028, %v1101
      %v1111 = vshrl.u32 2102212464, %v1102
      %v1112 = vor.u32 %v1110, %v1111
      %v1113 = vshll.u32 2102212464, %v1101
      %v1114 = vshrl.u32 920167782, %v1102
      %v1115 = vor.u32 %v1113, %v1114
      %v1116 = vshll.u32 920167782, %v1101
      %v1117 = vshrl.u32 1326507024, %v1102
      %v1118 = vor.u32 %v1116, %v1117
      %vm1119 = vcmp.lt.s32.totalorder %v1100, 1
      %vm1120 = vcmp.lt.s32.totalorder %v1100, 2
      %vm1121 = vcmp.lt.s32.totalorder %v1100, 3
      %vm1122 = vcmp.lt.s32.totalorder %v1100, 4
      %v1123 = vsel %vm1119, %v1103, %v1106
      %v1124 = vsel %vm1122, %v1112, 2102212464
      %v1125 = vsel %vm1121, %v1109, %v1124
      %v1126 = vsel %vm1120, %v1123, %v1125
      %v1127 = vsel %vm1119, %v1106, %v1109
      %v1128 = vsel %vm1122, %v1115, 920167782
      %v1129 = vsel %vm1121, %v1112, %v1128
      %v1130 = vsel %vm1120, %v1127, %v1129
      %v1131 = vsel %vm1119, %v1109, %v1112
      %v1132 = vsel %vm1122, %v1118, 1326507024
      %v1133 = vsel %vm1121, %v1115, %v1132
      %v1134 = vsel %vm1120, %v1131, %v1133
      %v1135 = vshll.u32 %v1095, 8
      %v1136 = vmul.u32.u64.compose %v1135, %v1134
      %v1137 = vextract.low.u32 %v1136
      %v1138 = vextract.high.u32 %v1136
      %v1139 = vmul.u32.u64.compose %v1135, %v1130
      %v1140 = vextract.low.u32 %v1139
      %v1141 = vextract.high.u32 %v1139
      %v1142 = vmul.u32 %v1135, %v1126
      %v1143 = vadd.s32 %v1138, %v1140
      %vm1144 = vc.u32 %v1138, %v1140
      %v1145 = vadd.s32 %v1141, 1
      %v1146 = vsel %vm1144, %v1145, %v1141
      %v1147 = vadd.s32 %v1142, %v1146
      %v1148 = vadd.s32 %v1147, 536870912
      %v1149 = vshrl.u32 %v1148, 30
      %v1150 = vshll.u32 %v1149, 30
      %v1151 = vsub.s32 %v1147, %v1150
      %vm1152 = vcmp.lt.s32.totalorder %v1151, 0
      %v1153 = vsub.s32 0, %v1151
      %v1154 = vsel %vm1152, %v1153, %v1151
      %v1155 = vclz %v1154
      %v1156 = vsub.s32 %v1155, 2
      %vm1157 = vcmp.gt.s32.totalorder 0, %v1156
      %v1158 = vsel %vm1157, 0, %v1156
      %v1159 = vsub.s32 32, %v1158
      %v1160 = vshll.u32 %v1151, %v1158
      %v1161 = vshrl.u32 %v1143, %v1159
      %v1162 = vor.u32 %v1160, %v1161
      %v1163 = vsub.s32 4294967266, %v1158
      %v1164 = vadd.s32 %v1163, 127
      %v1165 = vshll.u32 %v1164, 23
      %v1166 = vor.u32 4788187, %v1165
      %v1167 = vand.u32 2147483647, %v1166
      %v1169 = vcvt.s32.f32 %v1162
      %v1170 = vmul.f32 %v1169, %v1167
      %v1171 = vxor.u32 %v1170, 2147483648
      %v1172 = vsel %vm1089, %v1171, %v1170
      %v1173 = vsub.s32 4, %v1149
      %v1174 = vsel %vm1089, %v1173, %v1149
      %v1175 = vsel %vm1088, %v309, %v1172
      %v1176 = vsel %vm1088, 0, %v1174
      %v1177 = vcosq.f32.pop %v1175
      %v1178 = vsinq.f32.pop %v1175
      %vm1179 = vweird.f32 %v309
      %v1180 = vadd.s32 %v1176, 3
      %v1181 = vand.u32 %v1180, 3
      %vm1182 = vcmp.lt.s32.totalorder %v1181, 2
      %vm1183 = vcmp.eq.s32.totalorder %v1181, 0
      %v1184 = vxor.u32 %v1178, 2147483648
      %v1185 = vsel %vm1183, %v1177, %v1184
      %vm1186 = vcmp.eq.s32.totalorder %v1181, 2
      %v1187 = vxor.u32 %v1177, 2147483648
      %v1188 = vsel %vm1186, %v1187, %v1178
      %v1189 = vsel %vm1182, %v1185, %v1188
      %v1190 = vsel %vm1179, nan, %v1189
      %v1191 = vand.u32 2147483647, %v314
      %vm1192 = vcmp.le.f32.partialorder %v1191, 0.7853982
      %vm1193 = vcmp.lt.s32.totalorder %v314, 0
      %v1194 = vand.u32 %v314, 2139095040
      %v1195 = vshrl.u32 %v1194, 23
      %v1196 = vsub.s32 %v1195, 127
      %v1197 = vand.u32 2147483647, %v314
      %v1198 = vand.u32 %v1197, 8388607
      %v1199 = vor.u32 %v1198, 8388608
      %v1200 = vsub.s32 0, %v1199
      %v1201 = vadd.s32 %v1196, 1
      %vm1202 = vcmp.gt.s32.totalorder %v1201, 0
      %v1203 = vsel %vm1202, %v1201, 0
      %v1204 = vshrl.u32 %v1203, 5
      %v1205 = vand.u32 %v1203, 31
      %v1206 = vsub.s32 32, %v1205
      %v1207 = vshrl.u32 683565275, %v1206
      %v1208 = vshll.u32 683565275, %v1205
      %v1209 = vshrl.u32 2475754826, %v1206
      %v1210 = vor.u32 %v1208, %v1209
      %v1211 = vshll.u32 2475754826, %v1205
      %v1212 = vshrl.u32 2131351028, %v1206
      %v1213 = vor.u32 %v1211, %v1212
      %v1214 = vshll.u32 2131351028, %v1205
      %v1215 = vshrl.u32 2102212464, %v1206
      %v1216 = vor.u32 %v1214, %v1215
      %v1217 = vshll.u32 2102212464, %v1205
      %v1218 = vshrl.u32 920167782, %v1206
      %v1219 = vor.u32 %v1217, %v1218
      %v1220 = vshll.u32 920167782, %v1205
      %v1221 = vshrl.u32 1326507024, %v1206
      %v1222 = vor.u32 %v1220, %v1221
      %vm1223 = vcmp.lt.s32.totalorder %v1204, 1
      %vm1224 = vcmp.lt.s32.totalorder %v1204, 2
      %vm1225 = vcmp.lt.s32.totalorder %v1204, 3
      %vm1226 = vcmp.lt.s32.totalorder %v1204, 4
      %v1227 = vsel %vm1223, %v1207, %v1210
      %v1228 = vsel %vm1226, %v1216, 2102212464
      %v1229 = vsel %vm1225, %v1213, %v1228
      %v1230 = vsel %vm1224, %v1227, %v1229
      %v1231 = vsel %vm1223, %v1210, %v1213
      %v1232 = vsel %vm1226, %v1219, 920167782
      %v1233 = vsel %vm1225, %v1216, %v1232
      %v1234 = vsel %vm1224, %v1231, %v1233
      %v1235 = vsel %vm1223, %v1213, %v1216
      %v1236 = vsel %vm1226, %v1222, 1326507024
      %v1237 = vsel %vm1225, %v1219, %v1236
      %v1238 = vsel %vm1224, %v1235, %v1237
      %v1239 = vshll.u32 %v1199, 8
      %v1240 = vmul.u32.u64.compose %v1239, %v1238
      %v1241 = vextract.low.u32 %v1240
      %v1242 = vextract.high.u32 %v1240
      %v1243 = vmul.u32.u64.compose %v1239, %v1234
      %v1244 = vextract.low.u32 %v1243
      %v1245 = vextract.high.u32 %v1243
      %v1246 = vmul.u32 %v1239, %v1230
      %v1247 = vadd.s32 %v1242, %v1244
      %vm1248 = vc.u32 %v1242, %v1244
      %v1249 = vadd.s32 %v1245, 1
      %v1250 = vsel %vm1248, %v1249, %v1245
      %v1251 = vadd.s32 %v1246, %v1250
      %v1252 = vadd.s32 %v1251, 536870912
      %v1253 = vshrl.u32 %v1252, 30
      %v1254 = vshll.u32 %v1253, 30
      %v1255 = vsub.s32 %v1251, %v1254
      %vm1256 = vcmp.lt.s32.totalorder %v1255, 0
      %v1257 = vsub.s32 0, %v1255
      %v1258 = vsel %vm1256, %v1257, %v1255
      %v1259 = vclz %v1258
      %v1260 = vsub.s32 %v1259, 2
      %vm1261 = vcmp.gt.s32.totalorder 0, %v1260
      %v1262 = vsel %vm1261, 0, %v1260
      %v1263 = vsub.s32 32, %v1262
      %v1264 = vshll.u32 %v1255, %v1262
      %v1265 = vshrl.u32 %v1247, %v1263
      %v1266 = vor.u32 %v1264, %v1265
      %v1267 = vsub.s32 4294967266, %v1262
      %v1268 = vadd.s32 %v1267, 127
      %v1269 = vshll.u32 %v1268, 23
      %v1270 = vor.u32 4788187, %v1269
      %v1271 = vand.u32 2147483647, %v1270
      %v1273 = vcvt.s32.f32 %v1266
      %v1274 = vmul.f32 %v1273, %v1271
      %v1275 = vxor.u32 %v1274, 2147483648
      %v1276 = vsel %vm1193, %v1275, %v1274
      %v1277 = vsub.s32 4, %v1253
      %v1278 = vsel %vm1193, %v1277, %v1253
      %v1279 = vsel %vm1192, %v314, %v1276
      %v1280 = vsel %vm1192, 0, %v1278
      %v1281 = vcosq.f32.pop %v1279
      %v1282 = vsinq.f32.pop %v1279
      %vm1283 = vweird.f32 %v314
      %v1284 = vadd.s32 %v1280, 3
      %v1285 = vand.u32 %v1284, 3
      %vm1286 = vcmp.lt.s32.totalorder %v1285, 2
      %vm1287 = vcmp.eq.s32.totalorder %v1285, 0
      %v1288 = vxor.u32 %v1282, 2147483648
      %v1289 = vsel %vm1287, %v1281, %v1288
      %vm1290 = vcmp.eq.s32.totalorder %v1285, 2
      %v1291 = vxor.u32 %v1281, 2147483648
      %v1292 = vsel %vm1290, %v1291, %v1282
      %v1293 = vsel %vm1286, %v1289, %v1292
      %v1294 = vsel %vm1283, nan, %v1293
      %v1295 = vand.u32 2147483647, %v317
      %vm1296 = vcmp.le.f32.partialorder %v1295, 0.7853982
      %vm1297 = vcmp.lt.s32.totalorder %v317, 0
      %v1298 = vand.u32 %v317, 2139095040
      %v1299 = vshrl.u32 %v1298, 23
      %v1300 = vsub.s32 %v1299, 127
      %v1301 = vand.u32 2147483647, %v317
      %v1302 = vand.u32 %v1301, 8388607
      %v1303 = vor.u32 %v1302, 8388608
      %v1304 = vsub.s32 0, %v1303
      %v1305 = vadd.s32 %v1300, 1
      %vm1306 = vcmp.gt.s32.totalorder %v1305, 0
      %v1307 = vsel %vm1306, %v1305, 0
      %v1308 = vshrl.u32 %v1307, 5
      %v1309 = vand.u32 %v1307, 31
      %v1310 = vsub.s32 32, %v1309
      %v1311 = vshrl.u32 683565275, %v1310
      %v1312 = vshll.u32 683565275, %v1309
      %v1313 = vshrl.u32 2475754826, %v1310
      %v1314 = vor.u32 %v1312, %v1313
      %v1315 = vshll.u32 2475754826, %v1309
      %v1316 = vshrl.u32 2131351028, %v1310
      %v1317 = vor.u32 %v1315, %v1316
      %v1318 = vshll.u32 2131351028, %v1309
      %v1319 = vshrl.u32 2102212464, %v1310
      %v1320 = vor.u32 %v1318, %v1319
      %v1321 = vshll.u32 2102212464, %v1309
      %v1322 = vshrl.u32 920167782, %v1310
      %v1323 = vor.u32 %v1321, %v1322
      %v1324 = vshll.u32 920167782, %v1309
      %v1325 = vshrl.u32 1326507024, %v1310
      %v1326 = vor.u32 %v1324, %v1325
      %vm1327 = vcmp.lt.s32.totalorder %v1308, 1
      %vm1328 = vcmp.lt.s32.totalorder %v1308, 2
      %vm1329 = vcmp.lt.s32.totalorder %v1308, 3
      %vm1330 = vcmp.lt.s32.totalorder %v1308, 4
      %v1331 = vsel %vm1327, %v1311, %v1314
      %v1332 = vsel %vm1330, %v1320, 2102212464
      %v1333 = vsel %vm1329, %v1317, %v1332
      %v1334 = vsel %vm1328, %v1331, %v1333
      %v1335 = vsel %vm1327, %v1314, %v1317
      %v1336 = vsel %vm1330, %v1323, 920167782
      %v1337 = vsel %vm1329, %v1320, %v1336
      %v1338 = vsel %vm1328, %v1335, %v1337
      %v1339 = vsel %vm1327, %v1317, %v1320
      %v1340 = vsel %vm1330, %v1326, 1326507024
      %v1341 = vsel %vm1329, %v1323, %v1340
      %v1342 = vsel %vm1328, %v1339, %v1341
      %v1343 = vshll.u32 %v1303, 8
      %v1344 = vmul.u32.u64.compose %v1343, %v1342
      %v1345 = vextract.low.u32 %v1344
      %v1346 = vextract.high.u32 %v1344
      %v1347 = vmul.u32.u64.compose %v1343, %v1338
      %v1348 = vextract.low.u32 %v1347
      %v1349 = vextract.high.u32 %v1347
      %v1350 = vmul.u32 %v1343, %v1334
      %v1351 = vadd.s32 %v1346, %v1348
      %vm1352 = vc.u32 %v1346, %v1348
      %v1353 = vadd.s32 %v1349, 1
      %v1354 = vsel %vm1352, %v1353, %v1349
      %v1355 = vadd.s32 %v1350, %v1354
      %v1356 = vadd.s32 %v1355, 536870912
      %v1357 = vshrl.u32 %v1356, 30
      %v1358 = vshll.u32 %v1357, 30
      %v1359 = vsub.s32 %v1355, %v1358
      %vm1360 = vcmp.lt.s32.totalorder %v1359, 0
      %v1361 = vsub.s32 0, %v1359
      %v1362 = vsel %vm1360, %v1361, %v1359
      %v1363 = vclz %v1362
      %v1364 = vsub.s32 %v1363, 2
      %vm1365 = vcmp.gt.s32.totalorder 0, %v1364
      %v1366 = vsel %vm1365, 0, %v1364
      %v1367 = vsub.s32 32, %v1366
      %v1368 = vshll.u32 %v1359, %v1366
      %v1369 = vshrl.u32 %v1351, %v1367
      %v1370 = vor.u32 %v1368, %v1369
      %v1371 = vsub.s32 4294967266, %v1366
      %v1372 = vadd.s32 %v1371, 127
      %v1373 = vshll.u32 %v1372, 23
      %v1374 = vor.u32 4788187, %v1373
      %v1375 = vand.u32 2147483647, %v1374
      %v1377 = vcvt.s32.f32 %v1370
      %v1378 = vmul.f32 %v1377, %v1375
      %v1379 = vxor.u32 %v1378, 2147483648
      %v1380 = vsel %vm1297, %v1379, %v1378
      %v1381 = vsub.s32 4, %v1357
      %v1382 = vsel %vm1297, %v1381, %v1357
      %v1383 = vsel %vm1296, %v317, %v1380
      %v1384 = vsel %vm1296, 0, %v1382
      %v1385 = vcosq.f32.pop %v1383
      %v1386 = vsinq.f32.pop %v1383
      %vm1387 = vweird.f32 %v317
      %v1388 = vadd.s32 %v1384, 3
      %v1389 = vand.u32 %v1388, 3
      %vm1390 = vcmp.lt.s32.totalorder %v1389, 2
      %vm1391 = vcmp.eq.s32.totalorder %v1389, 0
      %v1392 = vxor.u32 %v1386, 2147483648
      %v1393 = vsel %vm1391, %v1385, %v1392
      %vm1394 = vcmp.eq.s32.totalorder %v1389, 2
      %v1395 = vxor.u32 %v1385, 2147483648
      %v1396 = vsel %vm1394, %v1395, %v1386
      %v1397 = vsel %vm1390, %v1393, %v1396
      %v1398 = vsel %vm1387, nan, %v1397
      %v1399 = vand.u32 2147483647, %v322
      %vm1400 = vcmp.le.f32.partialorder %v1399, 0.7853982
      %vm1401 = vcmp.lt.s32.totalorder %v322, 0
      %v1402 = vand.u32 %v322, 2139095040
      %v1403 = vshrl.u32 %v1402, 23
      %v1404 = vsub.s32 %v1403, 127
      %v1405 = vand.u32 2147483647, %v322
      %v1406 = vand.u32 %v1405, 8388607
      %v1407 = vor.u32 %v1406, 8388608
      %v1408 = vsub.s32 0, %v1407
      %v1409 = vadd.s32 %v1404, 1
      %vm1410 = vcmp.gt.s32.totalorder %v1409, 0
      %v1411 = vsel %vm1410, %v1409, 0
      %v1412 = vshrl.u32 %v1411, 5
      %v1413 = vand.u32 %v1411, 31
      %v1414 = vsub.s32 32, %v1413
      %v1415 = vshrl.u32 683565275, %v1414
      %v1416 = vshll.u32 683565275, %v1413
      %v1417 = vshrl.u32 2475754826, %v1414
      %v1418 = vor.u32 %v1416, %v1417
      %v1419 = vshll.u32 2475754826, %v1413
      %v1420 = vshrl.u32 2131351028, %v1414
      %v1421 = vor.u32 %v1419, %v1420
      %v1422 = vshll.u32 2131351028, %v1413
      %v1423 = vshrl.u32 2102212464, %v1414
      %v1424 = vor.u32 %v1422, %v1423
      %v1425 = vshll.u32 2102212464, %v1413
      %v1426 = vshrl.u32 920167782, %v1414
      %v1427 = vor.u32 %v1425, %v1426
      %v1428 = vshll.u32 920167782, %v1413
      %v1429 = vshrl.u32 1326507024, %v1414
      %v1430 = vor.u32 %v1428, %v1429
      %vm1431 = vcmp.lt.s32.totalorder %v1412, 1
      %vm1432 = vcmp.lt.s32.totalorder %v1412, 2
      %vm1433 = vcmp.lt.s32.totalorder %v1412, 3
      %vm1434 = vcmp.lt.s32.totalorder %v1412, 4
      %v1435 = vsel %vm1431, %v1415, %v1418
      %v1436 = vsel %vm1434, %v1424, 2102212464
      %v1437 = vsel %vm1433, %v1421, %v1436
      %v1438 = vsel %vm1432, %v1435, %v1437
      %v1439 = vsel %vm1431, %v1418, %v1421
      %v1440 = vsel %vm1434, %v1427, 920167782
      %v1441 = vsel %vm1433, %v1424, %v1440
      %v1442 = vsel %vm1432, %v1439, %v1441
      %v1443 = vsel %vm1431, %v1421, %v1424
      %v1444 = vsel %vm1434, %v1430, 1326507024
      %v1445 = vsel %vm1433, %v1427, %v1444
      %v1446 = vsel %vm1432, %v1443, %v1445
      %v1447 = vshll.u32 %v1407, 8
      %v1448 = vmul.u32.u64.compose %v1447, %v1446
      %v1449 = vextract.low.u32 %v1448
      %v1450 = vextract.high.u32 %v1448
      %v1451 = vmul.u32.u64.compose %v1447, %v1442
      %v1452 = vextract.low.u32 %v1451
      %v1453 = vextract.high.u32 %v1451
      %v1454 = vmul.u32 %v1447, %v1438
      %v1455 = vadd.s32 %v1450, %v1452
      %vm1456 = vc.u32 %v1450, %v1452
      %v1457 = vadd.s32 %v1453, 1
      %v1458 = vsel %vm1456, %v1457, %v1453
      %v1459 = vadd.s32 %v1454, %v1458
      %v1460 = vadd.s32 %v1459, 536870912
      %v1461 = vshrl.u32 %v1460, 30
      %v1462 = vshll.u32 %v1461, 30
      %v1463 = vsub.s32 %v1459, %v1462
      %vm1464 = vcmp.lt.s32.totalorder %v1463, 0
      %v1465 = vsub.s32 0, %v1463
      %v1466 = vsel %vm1464, %v1465, %v1463
      %v1467 = vclz %v1466
      %v1468 = vsub.s32 %v1467, 2
      %vm1469 = vcmp.gt.s32.totalorder 0, %v1468
      %v1470 = vsel %vm1469, 0, %v1468
      %v1471 = vsub.s32 32, %v1470
      %v1472 = vshll.u32 %v1463, %v1470
      %v1473 = vshrl.u32 %v1455, %v1471
      %v1474 = vor.u32 %v1472, %v1473
      %v1475 = vsub.s32 4294967266, %v1470
      %v1476 = vadd.s32 %v1475, 127
      %v1477 = vshll.u32 %v1476, 23
      %v1478 = vor.u32 4788187, %v1477
      %v1479 = vand.u32 2147483647, %v1478
      %v1481 = vcvt.s32.f32 %v1474
      %v1482 = vmul.f32 %v1481, %v1479
      %v1483 = vxor.u32 %v1482, 2147483648
      %v1484 = vsel %vm1401, %v1483, %v1482
      %v1485 = vsub.s32 4, %v1461
      %v1486 = vsel %vm1401, %v1485, %v1461
      %v1487 = vsel %vm1400, %v322, %v1484
      %v1488 = vsel %vm1400, 0, %v1486
      %v1489 = vcosq.f32.pop %v1487
      %v1490 = vsinq.f32.pop %v1487
      %vm1491 = vweird.f32 %v322
      %v1492 = vadd.s32 %v1488, 3
      %v1493 = vand.u32 %v1492, 3
      %vm1494 = vcmp.lt.s32.totalorder %v1493, 2
      %vm1495 = vcmp.eq.s32.totalorder %v1493, 0
      %v1496 = vxor.u32 %v1490, 2147483648
      %v1497 = vsel %vm1495, %v1489, %v1496
      %vm1498 = vcmp.eq.s32.totalorder %v1493, 2
      %v1499 = vxor.u32 %v1489, 2147483648
      %v1500 = vsel %vm1498, %v1499, %v1490
      %v1501 = vsel %vm1494, %v1497, %v1500
      %v1502 = vsel %vm1491, nan, %v1501
      %v1503 = vand.u32 2147483647, %v325
      %vm1504 = vcmp.le.f32.partialorder %v1503, 0.7853982
      %vm1505 = vcmp.lt.s32.totalorder %v325, 0
      %v1506 = vand.u32 %v325, 2139095040
      %v1507 = vshrl.u32 %v1506, 23
      %v1508 = vsub.s32 %v1507, 127
      %v1509 = vand.u32 2147483647, %v325
      %v1510 = vand.u32 %v1509, 8388607
      %v1511 = vor.u32 %v1510, 8388608
      %v1512 = vsub.s32 0, %v1511
      %v1513 = vadd.s32 %v1508, 1
      %vm1514 = vcmp.gt.s32.totalorder %v1513, 0
      %v1515 = vsel %vm1514, %v1513, 0
      %v1516 = vshrl.u32 %v1515, 5
      %v1517 = vand.u32 %v1515, 31
      %v1518 = vsub.s32 32, %v1517
      %v1519 = vshrl.u32 683565275, %v1518
      %v1520 = vshll.u32 683565275, %v1517
      %v1521 = vshrl.u32 2475754826, %v1518
      %v1522 = vor.u32 %v1520, %v1521
      %v1523 = vshll.u32 2475754826, %v1517
      %v1524 = vshrl.u32 2131351028, %v1518
      %v1525 = vor.u32 %v1523, %v1524
      %v1526 = vshll.u32 2131351028, %v1517
      %v1527 = vshrl.u32 2102212464, %v1518
      %v1528 = vor.u32 %v1526, %v1527
      %v1529 = vshll.u32 2102212464, %v1517
      %v1530 = vshrl.u32 920167782, %v1518
      %v1531 = vor.u32 %v1529, %v1530
      %v1532 = vshll.u32 920167782, %v1517
      %v1533 = vshrl.u32 1326507024, %v1518
      %v1534 = vor.u32 %v1532, %v1533
      %vm1535 = vcmp.lt.s32.totalorder %v1516, 1
      %vm1536 = vcmp.lt.s32.totalorder %v1516, 2
      %vm1537 = vcmp.lt.s32.totalorder %v1516, 3
      %vm1538 = vcmp.lt.s32.totalorder %v1516, 4
      %v1539 = vsel %vm1535, %v1519, %v1522
      %v1540 = vsel %vm1538, %v1528, 2102212464
      %v1541 = vsel %vm1537, %v1525, %v1540
      %v1542 = vsel %vm1536, %v1539, %v1541
      %v1543 = vsel %vm1535, %v1522, %v1525
      %v1544 = vsel %vm1538, %v1531, 920167782
      %v1545 = vsel %vm1537, %v1528, %v1544
      %v1546 = vsel %vm1536, %v1543, %v1545
      %v1547 = vsel %vm1535, %v1525, %v1528
      %v1548 = vsel %vm1538, %v1534, 1326507024
      %v1549 = vsel %vm1537, %v1531, %v1548
      %v1550 = vsel %vm1536, %v1547, %v1549
      %v1551 = vshll.u32 %v1511, 8
      %v1552 = vmul.u32.u64.compose %v1551, %v1550
      %v1553 = vextract.low.u32 %v1552
      %v1554 = vextract.high.u32 %v1552
      %v1555 = vmul.u32.u64.compose %v1551, %v1546
      %v1556 = vextract.low.u32 %v1555
      %v1557 = vextract.high.u32 %v1555
      %v1558 = vmul.u32 %v1551, %v1542
      %v1559 = vadd.s32 %v1554, %v1556
      %vm1560 = vc.u32 %v1554, %v1556
      %v1561 = vadd.s32 %v1557, 1
      %v1562 = vsel %vm1560, %v1561, %v1557
      %v1563 = vadd.s32 %v1558, %v1562
      %v1564 = vadd.s32 %v1563, 536870912
      %v1565 = vshrl.u32 %v1564, 30
      %v1566 = vshll.u32 %v1565, 30
      %v1567 = vsub.s32 %v1563, %v1566
      %vm1568 = vcmp.lt.s32.totalorder %v1567, 0
      %v1569 = vsub.s32 0, %v1567
      %v1570 = vsel %vm1568, %v1569, %v1567
      %v1571 = vclz %v1570
      %v1572 = vsub.s32 %v1571, 2
      %vm1573 = vcmp.gt.s32.totalorder 0, %v1572
      %v1574 = vsel %vm1573, 0, %v1572
      %v1575 = vsub.s32 32, %v1574
      %v1576 = vshll.u32 %v1567, %v1574
      %v1577 = vshrl.u32 %v1559, %v1575
      %v1578 = vor.u32 %v1576, %v1577
      %v1579 = vsub.s32 4294967266, %v1574
      %v1580 = vadd.s32 %v1579, 127
      %v1581 = vshll.u32 %v1580, 23
      %v1582 = vor.u32 4788187, %v1581
      %v1583 = vand.u32 2147483647, %v1582
      %v1585 = vcvt.s32.f32 %v1578
      %v1586 = vmul.f32 %v1585, %v1583
      %v1587 = vxor.u32 %v1586, 2147483648
      %v1588 = vsel %vm1505, %v1587, %v1586
      %v1589 = vsub.s32 4, %v1565
      %v1590 = vsel %vm1505, %v1589, %v1565
      %v1591 = vsel %vm1504, %v325, %v1588
      %v1592 = vsel %vm1504, 0, %v1590
      %v1593 = vcosq.f32.pop %v1591
      %v1594 = vsinq.f32.pop %v1591
      %vm1595 = vweird.f32 %v325
      %v1596 = vadd.s32 %v1592, 3
      %v1597 = vand.u32 %v1596, 3
      %vm1598 = vcmp.lt.s32.totalorder %v1597, 2
      %vm1599 = vcmp.eq.s32.totalorder %v1597, 0
      %v1600 = vxor.u32 %v1594, 2147483648
      %v1601 = vsel %vm1599, %v1593, %v1600
      %vm1602 = vcmp.eq.s32.totalorder %v1597, 2
      %v1603 = vxor.u32 %v1593, 2147483648
      %v1604 = vsel %vm1602, %v1603, %v1594
      %v1605 = vsel %vm1598, %v1601, %v1604
      %v1606 = vsel %vm1595, nan, %v1605
      %v1607 = vand.u32 2147483647, %v330
      %vm1608 = vcmp.le.f32.partialorder %v1607, 0.7853982
      %vm1609 = vcmp.lt.s32.totalorder %v330, 0
      %v1610 = vand.u32 %v330, 2139095040
      %v1611 = vshrl.u32 %v1610, 23
      %v1612 = vsub.s32 %v1611, 127
      %v1613 = vand.u32 2147483647, %v330
      %v1614 = vand.u32 %v1613, 8388607
      %v1615 = vor.u32 %v1614, 8388608
      %v1616 = vsub.s32 0, %v1615
      %v1617 = vadd.s32 %v1612, 1
      %vm1618 = vcmp.gt.s32.totalorder %v1617, 0
      %v1619 = vsel %vm1618, %v1617, 0
      %v1620 = vshrl.u32 %v1619, 5
      %v1621 = vand.u32 %v1619, 31
      %v1622 = vsub.s32 32, %v1621
      %v1623 = vshrl.u32 683565275, %v1622
      %v1624 = vshll.u32 683565275, %v1621
      %v1625 = vshrl.u32 2475754826, %v1622
      %v1626 = vor.u32 %v1624, %v1625
      %v1627 = vshll.u32 2475754826, %v1621
      %v1628 = vshrl.u32 2131351028, %v1622
      %v1629 = vor.u32 %v1627, %v1628
      %v1630 = vshll.u32 2131351028, %v1621
      %v1631 = vshrl.u32 2102212464, %v1622
      %v1632 = vor.u32 %v1630, %v1631
      %v1633 = vshll.u32 2102212464, %v1621
      %v1634 = vshrl.u32 920167782, %v1622
      %v1635 = vor.u32 %v1633, %v1634
      %v1636 = vshll.u32 920167782, %v1621
      %v1637 = vshrl.u32 1326507024, %v1622
      %v1638 = vor.u32 %v1636, %v1637
      %vm1639 = vcmp.lt.s32.totalorder %v1620, 1
      %vm1640 = vcmp.lt.s32.totalorder %v1620, 2
      %vm1641 = vcmp.lt.s32.totalorder %v1620, 3
      %vm1642 = vcmp.lt.s32.totalorder %v1620, 4
      %v1643 = vsel %vm1639, %v1623, %v1626
      %v1644 = vsel %vm1642, %v1632, 2102212464
      %v1645 = vsel %vm1641, %v1629, %v1644
      %v1646 = vsel %vm1640, %v1643, %v1645
      %v1647 = vsel %vm1639, %v1626, %v1629
      %v1648 = vsel %vm1642, %v1635, 920167782
      %v1649 = vsel %vm1641, %v1632, %v1648
      %v1650 = vsel %vm1640, %v1647, %v1649
      %v1651 = vsel %vm1639, %v1629, %v1632
      %v1652 = vsel %vm1642, %v1638, 1326507024
      %v1653 = vsel %vm1641, %v1635, %v1652
      %v1654 = vsel %vm1640, %v1651, %v1653
      %v1655 = vshll.u32 %v1615, 8
      %v1656 = vmul.u32.u64.compose %v1655, %v1654
      %v1657 = vextract.low.u32 %v1656
      %v1658 = vextract.high.u32 %v1656
      %v1659 = vmul.u32.u64.compose %v1655, %v1650
      %v1660 = vextract.low.u32 %v1659
      %v1661 = vextract.high.u32 %v1659
      %v1662 = vmul.u32 %v1655, %v1646
      %v1663 = vadd.s32 %v1658, %v1660
      %vm1664 = vc.u32 %v1658, %v1660
      %v1665 = vadd.s32 %v1661, 1
      %v1666 = vsel %vm1664, %v1665, %v1661
      %v1667 = vadd.s32 %v1662, %v1666
      %v1668 = vadd.s32 %v1667, 536870912
      %v1669 = vshrl.u32 %v1668, 30
      %v1670 = vshll.u32 %v1669, 30
      %v1671 = vsub.s32 %v1667, %v1670
      %vm1672 = vcmp.lt.s32.totalorder %v1671, 0
      %v1673 = vsub.s32 0, %v1671
      %v1674 = vsel %vm1672, %v1673, %v1671
      %v1675 = vclz %v1674
      %v1676 = vsub.s32 %v1675, 2
      %vm1677 = vcmp.gt.s32.totalorder 0, %v1676
      %v1678 = vsel %vm1677, 0, %v1676
      %v1679 = vsub.s32 32, %v1678
      %v1680 = vshll.u32 %v1671, %v1678
      %v1681 = vshrl.u32 %v1663, %v1679
      %v1682 = vor.u32 %v1680, %v1681
      %v1683 = vsub.s32 4294967266, %v1678
      %v1684 = vadd.s32 %v1683, 127
      %v1685 = vshll.u32 %v1684, 23
      %v1686 = vor.u32 4788187, %v1685
      %v1687 = vand.u32 2147483647, %v1686
      %v1689 = vcvt.s32.f32 %v1682
      %v1690 = vmul.f32 %v1689, %v1687
      %v1691 = vxor.u32 %v1690, 2147483648
      %v1692 = vsel %vm1609, %v1691, %v1690
      %v1693 = vsub.s32 4, %v1669
      %v1694 = vsel %vm1609, %v1693, %v1669
      %v1695 = vsel %vm1608, %v330, %v1692
      %v1696 = vsel %vm1608, 0, %v1694
      %v1697 = vcosq.f32.pop %v1695
      %v1698 = vsinq.f32.pop %v1695
      %vm1699 = vweird.f32 %v330
      %v1700 = vadd.s32 %v1696, 3
      %v1701 = vand.u32 %v1700, 3
      %vm1702 = vcmp.lt.s32.totalorder %v1701, 2
      %vm1703 = vcmp.eq.s32.totalorder %v1701, 0
      %v1704 = vxor.u32 %v1698, 2147483648
      %v1705 = vsel %vm1703, %v1697, %v1704
      %vm1706 = vcmp.eq.s32.totalorder %v1701, 2
      %v1707 = vxor.u32 %v1697, 2147483648
      %v1708 = vsel %vm1706, %v1707, %v1698
      %v1709 = vsel %vm1702, %v1705, %v1708
      %v1710 = vsel %vm1699, nan, %v1709
      %v1711 = vand.u32 2147483647, %v333
      %vm1712 = vcmp.le.f32.partialorder %v1711, 0.7853982
      %vm1713 = vcmp.lt.s32.totalorder %v333, 0
      %v1714 = vand.u32 %v333, 2139095040
      %v1715 = vshrl.u32 %v1714, 23
      %v1716 = vsub.s32 %v1715, 127
      %v1717 = vand.u32 2147483647, %v333
      %v1718 = vand.u32 %v1717, 8388607
      %v1719 = vor.u32 %v1718, 8388608
      %v1720 = vsub.s32 0, %v1719
      %v1721 = vadd.s32 %v1716, 1
      %vm1722 = vcmp.gt.s32.totalorder %v1721, 0
      %v1723 = vsel %vm1722, %v1721, 0
      %v1724 = vshrl.u32 %v1723, 5
      %v1725 = vand.u32 %v1723, 31
      %v1726 = vsub.s32 32, %v1725
      %v1727 = vshrl.u32 683565275, %v1726
      %v1728 = vshll.u32 683565275, %v1725
      %v1729 = vshrl.u32 2475754826, %v1726
      %v1730 = vor.u32 %v1728, %v1729
      %v1731 = vshll.u32 2475754826, %v1725
      %v1732 = vshrl.u32 2131351028, %v1726
      %v1733 = vor.u32 %v1731, %v1732
      %v1734 = vshll.u32 2131351028, %v1725
      %v1735 = vshrl.u32 2102212464, %v1726
      %v1736 = vor.u32 %v1734, %v1735
      %v1737 = vshll.u32 2102212464, %v1725
      %v1738 = vshrl.u32 920167782, %v1726
      %v1739 = vor.u32 %v1737, %v1738
      %v1740 = vshll.u32 920167782, %v1725
      %v1741 = vshrl.u32 1326507024, %v1726
      %v1742 = vor.u32 %v1740, %v1741
      %vm1743 = vcmp.lt.s32.totalorder %v1724, 1
      %vm1744 = vcmp.lt.s32.totalorder %v1724, 2
      %vm1745 = vcmp.lt.s32.totalorder %v1724, 3
      %vm1746 = vcmp.lt.s32.totalorder %v1724, 4
      %v1747 = vsel %vm1743, %v1727, %v1730
      %v1748 = vsel %vm1746, %v1736, 2102212464
      %v1749 = vsel %vm1745, %v1733, %v1748
      %v1750 = vsel %vm1744, %v1747, %v1749
      %v1751 = vsel %vm1743, %v1730, %v1733
      %v1752 = vsel %vm1746, %v1739, 920167782
      %v1753 = vsel %vm1745, %v1736, %v1752
      %v1754 = vsel %vm1744, %v1751, %v1753
      %v1755 = vsel %vm1743, %v1733, %v1736
      %v1756 = vsel %vm1746, %v1742, 1326507024
      %v1757 = vsel %vm1745, %v1739, %v1756
      %v1758 = vsel %vm1744, %v1755, %v1757
      %v1759 = vshll.u32 %v1719, 8
      %v1760 = vmul.u32.u64.compose %v1759, %v1758
      %v1761 = vextract.low.u32 %v1760
      %v1762 = vextract.high.u32 %v1760
      %v1763 = vmul.u32.u64.compose %v1759, %v1754
      %v1764 = vextract.low.u32 %v1763
      %v1765 = vextract.high.u32 %v1763
      %v1766 = vmul.u32 %v1759, %v1750
      %v1767 = vadd.s32 %v1762, %v1764
      %vm1768 = vc.u32 %v1762, %v1764
      %v1769 = vadd.s32 %v1765, 1
      %v1770 = vsel %vm1768, %v1769, %v1765
      %v1771 = vadd.s32 %v1766, %v1770
      %v1772 = vadd.s32 %v1771, 536870912
      %v1773 = vshrl.u32 %v1772, 30
      %v1774 = vshll.u32 %v1773, 30
      %v1775 = vsub.s32 %v1771, %v1774
      %vm1776 = vcmp.lt.s32.totalorder %v1775, 0
      %v1777 = vsub.s32 0, %v1775
      %v1778 = vsel %vm1776, %v1777, %v1775
      %v1779 = vclz %v1778
      %v1780 = vsub.s32 %v1779, 2
      %vm1781 = vcmp.gt.s32.totalorder 0, %v1780
      %v1782 = vsel %vm1781, 0, %v1780
      %v1783 = vsub.s32 32, %v1782
      %v1784 = vshll.u32 %v1775, %v1782
      %v1785 = vshrl.u32 %v1767, %v1783
      %v1786 = vor.u32 %v1784, %v1785
      %v1787 = vsub.s32 4294967266, %v1782
      %v1788 = vadd.s32 %v1787, 127
      %v1789 = vshll.u32 %v1788, 23
      %v1790 = vor.u32 4788187, %v1789
      %v1791 = vand.u32 2147483647, %v1790
      %v1793 = vcvt.s32.f32 %v1786
      %v1794 = vmul.f32 %v1793, %v1791
      %v1795 = vxor.u32 %v1794, 2147483648
      %v1796 = vsel %vm1713, %v1795, %v1794
      %v1797 = vsub.s32 4, %v1773
      %v1798 = vsel %vm1713, %v1797, %v1773
      %v1799 = vsel %vm1712, %v333, %v1796
      %v1800 = vsel %vm1712, 0, %v1798
      %v1801 = vcosq.f32.pop %v1799
      %v1802 = vsinq.f32.pop %v1799
      %vm1803 = vweird.f32 %v333
      %v1804 = vadd.s32 %v1800, 3
      %v1805 = vand.u32 %v1804, 3
      %vm1806 = vcmp.lt.s32.totalorder %v1805, 2
      %vm1807 = vcmp.eq.s32.totalorder %v1805, 0
      %v1808 = vxor.u32 %v1802, 2147483648
      %v1809 = vsel %vm1807, %v1801, %v1808
      %vm1810 = vcmp.eq.s32.totalorder %v1805, 2
      %v1811 = vxor.u32 %v1801, 2147483648
      %v1812 = vsel %vm1810, %v1811, %v1802
      %v1813 = vsel %vm1806, %v1809, %v1812
      %v1814 = vsel %vm1803, nan, %v1813
      %v1815 = vand.u32 2147483647, %v338
      %vm1816 = vcmp.le.f32.partialorder %v1815, 0.7853982
      %vm1817 = vcmp.lt.s32.totalorder %v338, 0
      %v1818 = vand.u32 %v338, 2139095040
      %v1819 = vshrl.u32 %v1818, 23
      %v1820 = vsub.s32 %v1819, 127
      %v1821 = vand.u32 2147483647, %v338
      %v1822 = vand.u32 %v1821, 8388607
      %v1823 = vor.u32 %v1822, 8388608
      %v1824 = vsub.s32 0, %v1823
      %v1825 = vadd.s32 %v1820, 1
      %vm1826 = vcmp.gt.s32.totalorder %v1825, 0
      %v1827 = vsel %vm1826, %v1825, 0
      %v1828 = vshrl.u32 %v1827, 5
      %v1829 = vand.u32 %v1827, 31
      %v1830 = vsub.s32 32, %v1829
      %v1831 = vshrl.u32 683565275, %v1830
      %v1832 = vshll.u32 683565275, %v1829
      %v1833 = vshrl.u32 2475754826, %v1830
      %v1834 = vor.u32 %v1832, %v1833
      %v1835 = vshll.u32 2475754826, %v1829
      %v1836 = vshrl.u32 2131351028, %v1830
      %v1837 = vor.u32 %v1835, %v1836
      %v1838 = vshll.u32 2131351028, %v1829
      %v1839 = vshrl.u32 2102212464, %v1830
      %v1840 = vor.u32 %v1838, %v1839
      %v1841 = vshll.u32 2102212464, %v1829
      %v1842 = vshrl.u32 920167782, %v1830
      %v1843 = vor.u32 %v1841, %v1842
      %v1844 = vshll.u32 920167782, %v1829
      %v1845 = vshrl.u32 1326507024, %v1830
      %v1846 = vor.u32 %v1844, %v1845
      %vm1847 = vcmp.lt.s32.totalorder %v1828, 1
      %vm1848 = vcmp.lt.s32.totalorder %v1828, 2
      %vm1849 = vcmp.lt.s32.totalorder %v1828, 3
      %vm1850 = vcmp.lt.s32.totalorder %v1828, 4
      %v1851 = vsel %vm1847, %v1831, %v1834
      %v1852 = vsel %vm1850, %v1840, 2102212464
      %v1853 = vsel %vm1849, %v1837, %v1852
      %v1854 = vsel %vm1848, %v1851, %v1853
      %v1855 = vsel %vm1847, %v1834, %v1837
      %v1856 = vsel %vm1850, %v1843, 920167782
      %v1857 = vsel %vm1849, %v1840, %v1856
      %v1858 = vsel %vm1848, %v1855, %v1857
      %v1859 = vsel %vm1847, %v1837, %v1840
      %v1860 = vsel %vm1850, %v1846, 1326507024
      %v1861 = vsel %vm1849, %v1843, %v1860
      %v1862 = vsel %vm1848, %v1859, %v1861
      %v1863 = vshll.u32 %v1823, 8
      %v1864 = vmul.u32.u64.compose %v1863, %v1862
      %v1865 = vextract.low.u32 %v1864
      %v1866 = vextract.high.u32 %v1864
      %v1867 = vmul.u32.u64.compose %v1863, %v1858
      %v1868 = vextract.low.u32 %v1867
      %v1869 = vextract.high.u32 %v1867
      %v1870 = vmul.u32 %v1863, %v1854
      %v1871 = vadd.s32 %v1866, %v1868
      %vm1872 = vc.u32 %v1866, %v1868
      %v1873 = vadd.s32 %v1869, 1
      %v1874 = vsel %vm1872, %v1873, %v1869
      %v1875 = vadd.s32 %v1870, %v1874
      %v1876 = vadd.s32 %v1875, 536870912
      %v1877 = vshrl.u32 %v1876, 30
      %v1878 = vshll.u32 %v1877, 30
      %v1879 = vsub.s32 %v1875, %v1878
      %vm1880 = vcmp.lt.s32.totalorder %v1879, 0
      %v1881 = vsub.s32 0, %v1879
      %v1882 = vsel %vm1880, %v1881, %v1879
      %v1883 = vclz %v1882
      %v1884 = vsub.s32 %v1883, 2
      %vm1885 = vcmp.gt.s32.totalorder 0, %v1884
      %v1886 = vsel %vm1885, 0, %v1884
      %v1887 = vsub.s32 32, %v1886
      %v1888 = vshll.u32 %v1879, %v1886
      %v1889 = vshrl.u32 %v1871, %v1887
      %v1890 = vor.u32 %v1888, %v1889
      %v1891 = vsub.s32 4294967266, %v1886
      %v1892 = vadd.s32 %v1891, 127
      %v1893 = vshll.u32 %v1892, 23
      %v1894 = vor.u32 4788187, %v1893
      %v1895 = vand.u32 2147483647, %v1894
      %v1897 = vcvt.s32.f32 %v1890
      %v1898 = vmul.f32 %v1897, %v1895
      %v1899 = vxor.u32 %v1898, 2147483648
      %v1900 = vsel %vm1817, %v1899, %v1898
      %v1901 = vsub.s32 4, %v1877
      %v1902 = vsel %vm1817, %v1901, %v1877
      %v1903 = vsel %vm1816, %v338, %v1900
      %v1904 = vsel %vm1816, 0, %v1902
      %v1905 = vcosq.f32.pop %v1903
      %v1906 = vsinq.f32.pop %v1903
      %vm1907 = vweird.f32 %v338
      %v1908 = vadd.s32 %v1904, 3
      %v1909 = vand.u32 %v1908, 3
      %vm1910 = vcmp.lt.s32.totalorder %v1909, 2
      %vm1911 = vcmp.eq.s32.totalorder %v1909, 0
      %v1912 = vxor.u32 %v1906, 2147483648
      %v1913 = vsel %vm1911, %v1905, %v1912
      %vm1914 = vcmp.eq.s32.totalorder %v1909, 2
      %v1915 = vxor.u32 %v1905, 2147483648
      %v1916 = vsel %vm1914, %v1915, %v1906
      %v1917 = vsel %vm1910, %v1913, %v1916
      %v1918 = vsel %vm1907, nan, %v1917
      %v1919 = vand.u32 2147483647, %v341
      %vm1920 = vcmp.le.f32.partialorder %v1919, 0.7853982
      %vm1921 = vcmp.lt.s32.totalorder %v341, 0
      %v1922 = vand.u32 %v341, 2139095040
      %v1923 = vshrl.u32 %v1922, 23
      %v1924 = vsub.s32 %v1923, 127
      %v1925 = vand.u32 2147483647, %v341
      %v1926 = vand.u32 %v1925, 8388607
      %v1927 = vor.u32 %v1926, 8388608
      %v1928 = vsub.s32 0, %v1927
      %v1929 = vadd.s32 %v1924, 1
      %vm1930 = vcmp.gt.s32.totalorder %v1929, 0
      %v1931 = vsel %vm1930, %v1929, 0
      %v1932 = vshrl.u32 %v1931, 5
      %v1933 = vand.u32 %v1931, 31
      %v1934 = vsub.s32 32, %v1933
      %v1935 = vshrl.u32 683565275, %v1934
      %v1936 = vshll.u32 683565275, %v1933
      %v1937 = vshrl.u32 2475754826, %v1934
      %v1938 = vor.u32 %v1936, %v1937
      %v1939 = vshll.u32 2475754826, %v1933
      %v1940 = vshrl.u32 2131351028, %v1934
      %v1941 = vor.u32 %v1939, %v1940
      %v1942 = vshll.u32 2131351028, %v1933
      %v1943 = vshrl.u32 2102212464, %v1934
      %v1944 = vor.u32 %v1942, %v1943
      %v1945 = vshll.u32 2102212464, %v1933
      %v1946 = vshrl.u32 920167782, %v1934
      %v1947 = vor.u32 %v1945, %v1946
      %v1948 = vshll.u32 920167782, %v1933
      %v1949 = vshrl.u32 1326507024, %v1934
      %v1950 = vor.u32 %v1948, %v1949
      %vm1951 = vcmp.lt.s32.totalorder %v1932, 1
      %vm1952 = vcmp.lt.s32.totalorder %v1932, 2
      %vm1953 = vcmp.lt.s32.totalorder %v1932, 3
      %vm1954 = vcmp.lt.s32.totalorder %v1932, 4
      %v1955 = vsel %vm1951, %v1935, %v1938
      %v1956 = vsel %vm1954, %v1944, 2102212464
      %v1957 = vsel %vm1953, %v1941, %v1956
      %v1958 = vsel %vm1952, %v1955, %v1957
      %v1959 = vsel %vm1951, %v1938, %v1941
      %v1960 = vsel %vm1954, %v1947, 920167782
      %v1961 = vsel %vm1953, %v1944, %v1960
      %v1962 = vsel %vm1952, %v1959, %v1961
      %v1963 = vsel %vm1951, %v1941, %v1944
      %v1964 = vsel %vm1954, %v1950, 1326507024
      %v1965 = vsel %vm1953, %v1947, %v1964
      %v1966 = vsel %vm1952, %v1963, %v1965
      %v1967 = vshll.u32 %v1927, 8
      %v1968 = vmul.u32.u64.compose %v1967, %v1966
      %v1969 = vextract.low.u32 %v1968
      %v1970 = vextract.high.u32 %v1968
      %v1971 = vmul.u32.u64.compose %v1967, %v1962
      %v1972 = vextract.low.u32 %v1971
      %v1973 = vextract.high.u32 %v1971
      %v1974 = vmul.u32 %v1967, %v1958
      %v1975 = vadd.s32 %v1970, %v1972
      %vm1976 = vc.u32 %v1970, %v1972
      %v1977 = vadd.s32 %v1973, 1
      %v1978 = vsel %vm1976, %v1977, %v1973
      %v1979 = vadd.s32 %v1974, %v1978
      %v1980 = vadd.s32 %v1979, 536870912
      %v1981 = vshrl.u32 %v1980, 30
      %v1982 = vshll.u32 %v1981, 30
      %v1983 = vsub.s32 %v1979, %v1982
      %vm1984 = vcmp.lt.s32.totalorder %v1983, 0
      %v1985 = vsub.s32 0, %v1983
      %v1986 = vsel %vm1984, %v1985, %v1983
      %v1987 = vclz %v1986
      %v1988 = vsub.s32 %v1987, 2
      %vm1989 = vcmp.gt.s32.totalorder 0, %v1988
      %v1990 = vsel %vm1989, 0, %v1988
      %v1991 = vsub.s32 32, %v1990
      %v1992 = vshll.u32 %v1983, %v1990
      %v1993 = vshrl.u32 %v1975, %v1991
      %v1994 = vor.u32 %v1992, %v1993
      %v1995 = vsub.s32 4294967266, %v1990
      %v1996 = vadd.s32 %v1995, 127
      %v1997 = vshll.u32 %v1996, 23
      %v1998 = vor.u32 4788187, %v1997
      %v1999 = vand.u32 2147483647, %v1998
      %v2001 = vcvt.s32.f32 %v1994
      %v2002 = vmul.f32 %v2001, %v1999
      %v2003 = vxor.u32 %v2002, 2147483648
      %v2004 = vsel %vm1921, %v2003, %v2002
      %v2005 = vsub.s32 4, %v1981
      %v2006 = vsel %vm1921, %v2005, %v1981
      %v2007 = vsel %vm1920, %v341, %v2004
      %v2008 = vsel %vm1920, 0, %v2006
      %v2009 = vcosq.f32.pop %v2007
      %v2010 = vsinq.f32.pop %v2007
      %vm2011 = vweird.f32 %v341
      %v2012 = vadd.s32 %v2008, 3
      %v2013 = vand.u32 %v2012, 3
      %vm2014 = vcmp.lt.s32.totalorder %v2013, 2
      %vm2015 = vcmp.eq.s32.totalorder %v2013, 0
      %v2016 = vxor.u32 %v2010, 2147483648
      %v2017 = vsel %vm2015, %v2009, %v2016
      %vm2018 = vcmp.eq.s32.totalorder %v2013, 2
      %v2019 = vxor.u32 %v2009, 2147483648
      %v2020 = vsel %vm2018, %v2019, %v2010
      %v2021 = vsel %vm2014, %v2017, %v2020
      %v2022 = vsel %vm2011, nan, %v2021
      %v2023 = vand.u32 2147483647, %v346
      %vm2024 = vcmp.le.f32.partialorder %v2023, 0.7853982
      %vm2025 = vcmp.lt.s32.totalorder %v346, 0
      %v2026 = vand.u32 %v346, 2139095040
      %v2027 = vshrl.u32 %v2026, 23
      %v2028 = vsub.s32 %v2027, 127
      %v2029 = vand.u32 2147483647, %v346
      %v2030 = vand.u32 %v2029, 8388607
      %v2031 = vor.u32 %v2030, 8388608
      %v2032 = vsub.s32 0, %v2031
      %v2033 = vadd.s32 %v2028, 1
      %vm2034 = vcmp.gt.s32.totalorder %v2033, 0
      %v2035 = vsel %vm2034, %v2033, 0
      %v2036 = vshrl.u32 %v2035, 5
      %v2037 = vand.u32 %v2035, 31
      %v2038 = vsub.s32 32, %v2037
      %v2039 = vshrl.u32 683565275, %v2038
      %v2040 = vshll.u32 683565275, %v2037
      %v2041 = vshrl.u32 2475754826, %v2038
      %v2042 = vor.u32 %v2040, %v2041
      %v2043 = vshll.u32 2475754826, %v2037
      %v2044 = vshrl.u32 2131351028, %v2038
      %v2045 = vor.u32 %v2043, %v2044
      %v2046 = vshll.u32 2131351028, %v2037
      %v2047 = vshrl.u32 2102212464, %v2038
      %v2048 = vor.u32 %v2046, %v2047
      %v2049 = vshll.u32 2102212464, %v2037
      %v2050 = vshrl.u32 920167782, %v2038
      %v2051 = vor.u32 %v2049, %v2050
      %v2052 = vshll.u32 920167782, %v2037
      %v2053 = vshrl.u32 1326507024, %v2038
      %v2054 = vor.u32 %v2052, %v2053
      %vm2055 = vcmp.lt.s32.totalorder %v2036, 1
      %vm2056 = vcmp.lt.s32.totalorder %v2036, 2
      %vm2057 = vcmp.lt.s32.totalorder %v2036, 3
      %vm2058 = vcmp.lt.s32.totalorder %v2036, 4
      %v2059 = vsel %vm2055, %v2039, %v2042
      %v2060 = vsel %vm2058, %v2048, 2102212464
      %v2061 = vsel %vm2057, %v2045, %v2060
      %v2062 = vsel %vm2056, %v2059, %v2061
      %v2063 = vsel %vm2055, %v2042, %v2045
      %v2064 = vsel %vm2058, %v2051, 920167782
      %v2065 = vsel %vm2057, %v2048, %v2064
      %v2066 = vsel %vm2056, %v2063, %v2065
      %v2067 = vsel %vm2055, %v2045, %v2048
      %v2068 = vsel %vm2058, %v2054, 1326507024
      %v2069 = vsel %vm2057, %v2051, %v2068
      %v2070 = vsel %vm2056, %v2067, %v2069
      %v2071 = vshll.u32 %v2031, 8
      %v2072 = vmul.u32.u64.compose %v2071, %v2070
      %v2073 = vextract.low.u32 %v2072
      %v2074 = vextract.high.u32 %v2072
      %v2075 = vmul.u32.u64.compose %v2071, %v2066
      %v2076 = vextract.low.u32 %v2075
      %v2077 = vextract.high.u32 %v2075
      %v2078 = vmul.u32 %v2071, %v2062
      %v2079 = vadd.s32 %v2074, %v2076
      %vm2080 = vc.u32 %v2074, %v2076
      %v2081 = vadd.s32 %v2077, 1
      %v2082 = vsel %vm2080, %v2081, %v2077
      %v2083 = vadd.s32 %v2078, %v2082
      %v2084 = vadd.s32 %v2083, 536870912
      %v2085 = vshrl.u32 %v2084, 30
      %v2086 = vshll.u32 %v2085, 30
      %v2087 = vsub.s32 %v2083, %v2086
      %vm2088 = vcmp.lt.s32.totalorder %v2087, 0
      %v2089 = vsub.s32 0, %v2087
      %v2090 = vsel %vm2088, %v2089, %v2087
      %v2091 = vclz %v2090
      %v2092 = vsub.s32 %v2091, 2
      %vm2093 = vcmp.gt.s32.totalorder 0, %v2092
      %v2094 = vsel %vm2093, 0, %v2092
      %v2095 = vsub.s32 32, %v2094
      %v2096 = vshll.u32 %v2087, %v2094
      %v2097 = vshrl.u32 %v2079, %v2095
      %v2098 = vor.u32 %v2096, %v2097
      %v2099 = vsub.s32 4294967266, %v2094
      %v2100 = vadd.s32 %v2099, 127
      %v2101 = vshll.u32 %v2100, 23
      %v2102 = vor.u32 4788187, %v2101
      %v2103 = vand.u32 2147483647, %v2102
      %v2105 = vcvt.s32.f32 %v2098
      %v2106 = vmul.f32 %v2105, %v2103
      %v2107 = vxor.u32 %v2106, 2147483648
      %v2108 = vsel %vm2025, %v2107, %v2106
      %v2109 = vsub.s32 4, %v2085
      %v2110 = vsel %vm2025, %v2109, %v2085
      %v2111 = vsel %vm2024, %v346, %v2108
      %v2112 = vsel %vm2024, 0, %v2110
      %v2113 = vcosq.f32.pop %v2111
      %v2114 = vsinq.f32.pop %v2111
      %vm2115 = vweird.f32 %v346
      %v2116 = vadd.s32 %v2112, 3
      %v2117 = vand.u32 %v2116, 3
      %vm2118 = vcmp.lt.s32.totalorder %v2117, 2
      %vm2119 = vcmp.eq.s32.totalorder %v2117, 0
      %v2120 = vxor.u32 %v2114, 2147483648
      %v2121 = vsel %vm2119, %v2113, %v2120
      %vm2122 = vcmp.eq.s32.totalorder %v2117, 2
      %v2123 = vxor.u32 %v2113, 2147483648
      %v2124 = vsel %vm2122, %v2123, %v2114
      %v2125 = vsel %vm2118, %v2121, %v2124
      %v2126 = vsel %vm2115, nan, %v2125
      %v2127 = vand.u32 2147483647, %v349
      %vm2128 = vcmp.le.f32.partialorder %v2127, 0.7853982
      %vm2129 = vcmp.lt.s32.totalorder %v349, 0
      %v2130 = vand.u32 %v349, 2139095040
      %v2131 = vshrl.u32 %v2130, 23
      %v2132 = vsub.s32 %v2131, 127
      %v2133 = vand.u32 2147483647, %v349
      %v2134 = vand.u32 %v2133, 8388607
      %v2135 = vor.u32 %v2134, 8388608
      %v2136 = vsub.s32 0, %v2135
      %v2137 = vadd.s32 %v2132, 1
      %vm2138 = vcmp.gt.s32.totalorder %v2137, 0
      %v2139 = vsel %vm2138, %v2137, 0
      %v2140 = vshrl.u32 %v2139, 5
      %v2141 = vand.u32 %v2139, 31
      %v2142 = vsub.s32 32, %v2141
      %v2143 = vshrl.u32 683565275, %v2142
      %v2144 = vshll.u32 683565275, %v2141
      %v2145 = vshrl.u32 2475754826, %v2142
      %v2146 = vor.u32 %v2144, %v2145
      %v2147 = vshll.u32 2475754826, %v2141
      %v2148 = vshrl.u32 2131351028, %v2142
      %v2149 = vor.u32 %v2147, %v2148
      %v2150 = vshll.u32 2131351028, %v2141
      %v2151 = vshrl.u32 2102212464, %v2142
      %v2152 = vor.u32 %v2150, %v2151
      %v2153 = vshll.u32 2102212464, %v2141
      %v2154 = vshrl.u32 920167782, %v2142
      %v2155 = vor.u32 %v2153, %v2154
      %v2156 = vshll.u32 920167782, %v2141
      %v2157 = vshrl.u32 1326507024, %v2142
      %v2158 = vor.u32 %v2156, %v2157
      %vm2159 = vcmp.lt.s32.totalorder %v2140, 1
      %vm2160 = vcmp.lt.s32.totalorder %v2140, 2
      %vm2161 = vcmp.lt.s32.totalorder %v2140, 3
      %vm2162 = vcmp.lt.s32.totalorder %v2140, 4
      %v2163 = vsel %vm2159, %v2143, %v2146
      %v2164 = vsel %vm2162, %v2152, 2102212464
      %v2165 = vsel %vm2161, %v2149, %v2164
      %v2166 = vsel %vm2160, %v2163, %v2165
      %v2167 = vsel %vm2159, %v2146, %v2149
      %v2168 = vsel %vm2162, %v2155, 920167782
      %v2169 = vsel %vm2161, %v2152, %v2168
      %v2170 = vsel %vm2160, %v2167, %v2169
      %v2171 = vsel %vm2159, %v2149, %v2152
      %v2172 = vsel %vm2162, %v2158, 1326507024
      %v2173 = vsel %vm2161, %v2155, %v2172
      %v2174 = vsel %vm2160, %v2171, %v2173
      %v2175 = vshll.u32 %v2135, 8
      %v2176 = vmul.u32.u64.compose %v2175, %v2174
      %v2177 = vextract.low.u32 %v2176
      %v2178 = vextract.high.u32 %v2176
      %v2179 = vmul.u32.u64.compose %v2175, %v2170
      %v2180 = vextract.low.u32 %v2179
      %v2181 = vextract.high.u32 %v2179
      %v2182 = vmul.u32 %v2175, %v2166
      %v2183 = vadd.s32 %v2178, %v2180
      %vm2184 = vc.u32 %v2178, %v2180
      %v2185 = vadd.s32 %v2181, 1
      %v2186 = vsel %vm2184, %v2185, %v2181
      %v2187 = vadd.s32 %v2182, %v2186
      %v2188 = vadd.s32 %v2187, 536870912
      %v2189 = vshrl.u32 %v2188, 30
      %v2190 = vshll.u32 %v2189, 30
      %v2191 = vsub.s32 %v2187, %v2190
      %vm2192 = vcmp.lt.s32.totalorder %v2191, 0
      %v2193 = vsub.s32 0, %v2191
      %v2194 = vsel %vm2192, %v2193, %v2191
      %v2195 = vclz %v2194
      %v2196 = vsub.s32 %v2195, 2
      %vm2197 = vcmp.gt.s32.totalorder 0, %v2196
      %v2198 = vsel %vm2197, 0, %v2196
      %v2199 = vsub.s32 32, %v2198
      %v2200 = vshll.u32 %v2191, %v2198
      %v2201 = vshrl.u32 %v2183, %v2199
      %v2202 = vor.u32 %v2200, %v2201
      %v2203 = vsub.s32 4294967266, %v2198
      %v2204 = vadd.s32 %v2203, 127
      %v2205 = vshll.u32 %v2204, 23
      %v2206 = vor.u32 4788187, %v2205
      %v2207 = vand.u32 2147483647, %v2206
      %v2209 = vcvt.s32.f32 %v2202
      %v2210 = vmul.f32 %v2209, %v2207
      %v2211 = vxor.u32 %v2210, 2147483648
      %v2212 = vsel %vm2129, %v2211, %v2210
      %v2213 = vsub.s32 4, %v2189
      %v2214 = vsel %vm2129, %v2213, %v2189
      %v2215 = vsel %vm2128, %v349, %v2212
      %v2216 = vsel %vm2128, 0, %v2214
      %v2217 = vcosq.f32.pop %v2215
      %v2218 = vsinq.f32.pop %v2215
      %vm2219 = vweird.f32 %v349
      %v2220 = vadd.s32 %v2216, 3
      %v2221 = vand.u32 %v2220, 3
      %vm2222 = vcmp.lt.s32.totalorder %v2221, 2
      %vm2223 = vcmp.eq.s32.totalorder %v2221, 0
      %v2224 = vxor.u32 %v2218, 2147483648
      %v2225 = vsel %vm2223, %v2217, %v2224
      %vm2226 = vcmp.eq.s32.totalorder %v2221, 2
      %v2227 = vxor.u32 %v2217, 2147483648
      %v2228 = vsel %vm2226, %v2227, %v2218
      %v2229 = vsel %vm2222, %v2225, %v2228
      %v2230 = vsel %vm2219, nan, %v2229
      %v2231 = vand.u32 2147483647, %v354
      %vm2232 = vcmp.le.f32.partialorder %v2231, 0.7853982
      %vm2233 = vcmp.lt.s32.totalorder %v354, 0
      %v2234 = vand.u32 %v354, 2139095040
      %v2235 = vshrl.u32 %v2234, 23
      %v2236 = vsub.s32 %v2235, 127
      %v2237 = vand.u32 2147483647, %v354
      %v2238 = vand.u32 %v2237, 8388607
      %v2239 = vor.u32 %v2238, 8388608
      %v2240 = vsub.s32 0, %v2239
      %v2241 = vadd.s32 %v2236, 1
      %vm2242 = vcmp.gt.s32.totalorder %v2241, 0
      %v2243 = vsel %vm2242, %v2241, 0
      %v2244 = vshrl.u32 %v2243, 5
      %v2245 = vand.u32 %v2243, 31
      %v2246 = vsub.s32 32, %v2245
      %v2247 = vshrl.u32 683565275, %v2246
      %v2248 = vshll.u32 683565275, %v2245
      %v2249 = vshrl.u32 2475754826, %v2246
      %v2250 = vor.u32 %v2248, %v2249
      %v2251 = vshll.u32 2475754826, %v2245
      %v2252 = vshrl.u32 2131351028, %v2246
      %v2253 = vor.u32 %v2251, %v2252
      %v2254 = vshll.u32 2131351028, %v2245
      %v2255 = vshrl.u32 2102212464, %v2246
      %v2256 = vor.u32 %v2254, %v2255
      %v2257 = vshll.u32 2102212464, %v2245
      %v2258 = vshrl.u32 920167782, %v2246
      %v2259 = vor.u32 %v2257, %v2258
      %v2260 = vshll.u32 920167782, %v2245
      %v2261 = vshrl.u32 1326507024, %v2246
      %v2262 = vor.u32 %v2260, %v2261
      %vm2263 = vcmp.lt.s32.totalorder %v2244, 1
      %vm2264 = vcmp.lt.s32.totalorder %v2244, 2
      %vm2265 = vcmp.lt.s32.totalorder %v2244, 3
      %vm2266 = vcmp.lt.s32.totalorder %v2244, 4
      %v2267 = vsel %vm2263, %v2247, %v2250
      %v2268 = vsel %vm2266, %v2256, 2102212464
      %v2269 = vsel %vm2265, %v2253, %v2268
      %v2270 = vsel %vm2264, %v2267, %v2269
      %v2271 = vsel %vm2263, %v2250, %v2253
      %v2272 = vsel %vm2266, %v2259, 920167782
      %v2273 = vsel %vm2265, %v2256, %v2272
      %v2274 = vsel %vm2264, %v2271, %v2273
      %v2275 = vsel %vm2263, %v2253, %v2256
      %v2276 = vsel %vm2266, %v2262, 1326507024
      %v2277 = vsel %vm2265, %v2259, %v2276
      %v2278 = vsel %vm2264, %v2275, %v2277
      %v2279 = vshll.u32 %v2239, 8
      %v2280 = vmul.u32.u64.compose %v2279, %v2278
      %v2281 = vextract.low.u32 %v2280
      %v2282 = vextract.high.u32 %v2280
      %v2283 = vmul.u32.u64.compose %v2279, %v2274
      %v2284 = vextract.low.u32 %v2283
      %v2285 = vextract.high.u32 %v2283
      %v2286 = vmul.u32 %v2279, %v2270
      %v2287 = vadd.s32 %v2282, %v2284
      %vm2288 = vc.u32 %v2282, %v2284
      %v2289 = vadd.s32 %v2285, 1
      %v2290 = vsel %vm2288, %v2289, %v2285
      %v2291 = vadd.s32 %v2286, %v2290
      %v2292 = vadd.s32 %v2291, 536870912
      %v2293 = vshrl.u32 %v2292, 30
      %v2294 = vshll.u32 %v2293, 30
      %v2295 = vsub.s32 %v2291, %v2294
      %vm2296 = vcmp.lt.s32.totalorder %v2295, 0
      %v2297 = vsub.s32 0, %v2295
      %v2298 = vsel %vm2296, %v2297, %v2295
      %v2299 = vclz %v2298
      %v2300 = vsub.s32 %v2299, 2
      %vm2301 = vcmp.gt.s32.totalorder 0, %v2300
      %v2302 = vsel %vm2301, 0, %v2300
      %v2303 = vsub.s32 32, %v2302
      %v2304 = vshll.u32 %v2295, %v2302
      %v2305 = vshrl.u32 %v2287, %v2303
      %v2306 = vor.u32 %v2304, %v2305
      %v2307 = vsub.s32 4294967266, %v2302
      %v2308 = vadd.s32 %v2307, 127
      %v2309 = vshll.u32 %v2308, 23
      %v2310 = vor.u32 4788187, %v2309
      %v2311 = vand.u32 2147483647, %v2310
      %v2313 = vcvt.s32.f32 %v2306
      %v2314 = vmul.f32 %v2313, %v2311
      %v2315 = vxor.u32 %v2314, 2147483648
      %v2316 = vsel %vm2233, %v2315, %v2314
      %v2317 = vsub.s32 4, %v2293
      %v2318 = vsel %vm2233, %v2317, %v2293
      %v2319 = vsel %vm2232, %v354, %v2316
      %v2320 = vsel %vm2232, 0, %v2318
      %v2321 = vcosq.f32.pop %v2319
      %v2322 = vsinq.f32.pop %v2319
      %vm2323 = vweird.f32 %v354
      %v2324 = vadd.s32 %v2320, 3
      %v2325 = vand.u32 %v2324, 3
      %vm2326 = vcmp.lt.s32.totalorder %v2325, 2
      %vm2327 = vcmp.eq.s32.totalorder %v2325, 0
      %v2328 = vxor.u32 %v2322, 2147483648
      %v2329 = vsel %vm2327, %v2321, %v2328
      %vm2330 = vcmp.eq.s32.totalorder %v2325, 2
      %v2331 = vxor.u32 %v2321, 2147483648
      %v2332 = vsel %vm2330, %v2331, %v2322
      %v2333 = vsel %vm2326, %v2329, %v2332
      %v2334 = vsel %vm2323, nan, %v2333
      %vm2335 = vcmask 261120
      %2336 = vst.msk [vmem:[%s172] sm:$0xff] %vm2335, %v462
      %2337 = vst.msk [vmem:[%s172 + $0x8] sm:$0xff] %vm2335, %v566
      %2338 = vst.msk [vmem:[%s172 + $0x10] sm:$0xff] %vm2335, %v670
      %2339 = vst.msk [vmem:[%s172 + $0x18] sm:$0xff] %vm2335, %v774
      %2340 = vst.msk [vmem:[%s172 + $0x20] sm:$0xff] %vm2335, %v878
      %2341 = vst.msk [vmem:[%s172 + $0x28] sm:$0xff] %vm2335, %v982
      %2342 = vst.msk [vmem:[%s172 + $0x30] sm:$0xff] %vm2335, %v1086
      %2343 = vst.msk [vmem:[%s172 + $0x38] sm:$0xff] %vm2335, %v1190
      %2344 = vst.msk [vmem:[%s172 + $0x40] sm:$0xff] %vm2335, %v1294
      %2345 = vst.msk [vmem:[%s172 + $0x48] sm:$0xff] %vm2335, %v1398
      %2346 = vst.msk [vmem:[%s172 + $0x50] sm:$0xff] %vm2335, %v1502
      %2347 = vst.msk [vmem:[%s172 + $0x58] sm:$0xff] %vm2335, %v1606
      %2348 = vst.msk [vmem:[%s172 + $0x60] sm:$0xff] %vm2335, %v1710
      %2349 = vst.msk [vmem:[%s172 + $0x68] sm:$0xff] %vm2335, %v1814
      %2350 = vst.msk [vmem:[%s172 + $0x70] sm:$0xff] %vm2335, %v1918
      %2351 = vst.msk [vmem:[%s172 + $0x78] sm:$0xff] %vm2335, %v2022
      %2352 = vst.msk [vmem:[%s172 + $0x80] sm:$0xff] %vm2335, %v2126
      %2353 = vst.msk [vmem:[%s172 + $0x88] sm:$0xff] %vm2335, %v2230
      %2354 = vst.msk [vmem:[%s172 + $0x90] sm:$0xff] %vm2335, %v2334
      %s2355 = smul.u32 19, %s14
      %p2356 = scmp.lt.s32.totalorder %s2355, 37
      %s2357 = scalar_select %p2356, %s2355, 37
      %s2358 = smul.addr %s2357, 8
      %s2359 = scalar_lea.vmem %s3, %s2358
      // Predicated region
      $region33: #{tpu_custom_call.1} parent=31 // pred_check
        %p2360 = pneg %p100
      $region34: #{tpu_custom_call.1} parent=31 // pred_check_branch
        %2362 = sbr.rel (%p2360) target = $region36
      $region35: #{tpu_custom_call.1} parent=31 // pred_region
        %s2363 = smul.u32 19, %s14
      $region36: #{tpu_custom_call.1} parent=31 // pred_fallthru
        _
    $region32: #{tpu_custom_call.1} parent=5 // pred_fallthru
      _
    %p2364 = scmp.le.s32.totalorder 2, %s9
    // Predicated region
    $region37: #{tpu_custom_call.1} parent=5 // pred_check
      %p2365 = pneg %p2364
    $region38: #{tpu_custom_call.1} parent=5 // pred_check_branch
      %2367 = sbr.rel (%p2365) target = $region40
    $region39: #{tpu_custom_call.1} parent=5 // pred_region
      %s2368 = ssub.s32 %s9, 2
      // Predicated region
      $region41: #{tpu_custom_call.1} parent=39 // pred_check
        %p2369 = pneg %p106
      $region42: #{tpu_custom_call.1} parent=39 // pred_check_branch
        %2371 = sbr.rel (%p2369) target = $region44
      $region43: #{tpu_custom_call.1} parent=39 // pred_region
        %s2372 = smul.u32 19, %s15
        %p2373 = scmp.lt.s32.totalorder %s2372, 37
        %s2374 = scalar_select %p2373, %s2372, 37
        %s2375 = smul.addr %s2374, 8
        %s2376 = scalar_lea.vmem %s3, %s2375
      $region44: #{tpu_custom_call.1} parent=39 // pred_fallthru
        _
    $region40: #{tpu_custom_call.1} parent=5 // pred_fallthru
      _
  $region6: #{tpu_custom_call.1} parent=0 // loop_footer
    %s13 = sadd.s32 1, %s9
  $region7: #{tpu_custom_call.1} parent=0 // loop_footer_branch
    %8 = sbr.rel target = $region3
  $region8: #{tpu_custom_call.1} parent=0 // loop_exit
    _

</llo_original>
